<compile_context>
chip_gen: v5e
topology: v5e:2x2
jax: 0.10.0
libtpu: 0.0.40
codegen_flags: <defaults>
</compile_context>

<pallas_src>
import functools

import jax
import jax.numpy as jnp
from jax.experimental import pallas as pl
from jax.experimental.pallas import tpu as pltpu


# ----------------------------------------------------------------------------
# Glue emulating the (unspecified) format_state / get_number_of_channels
# ----------------------------------------------------------------------------
def format_state(state):
    """state: list (length B) of dicts mapping thing -> (n_channels_i, D).

    Returns (B, sum_i n_channels_i, D) float32.
    """
    # TODO(synk): original format_state (pad_sequence-based ragged batching) is not
    # in the spec; equal-keyed, equal-channel dicts per batch element are assumed.
    keys = list(state[0].keys())
    per_sample = [jnp.concatenate([s[k] for k in keys], axis=0) for s in state]
    return jnp.stack(per_sample, axis=0).astype(jnp.float32)


def get_number_of_channels(state):
    """Mirrors HierarchicalDeepSet.get_number_of_channels."""
    if isinstance(state, list):
        state = state[0]
    return [int(v.shape[0]) for v in state.values()]


def _round_up(x, m):
    return ((x + m - 1) // m) * m


def _choose_batch_tile(B, N, feat):
    """Batch tile: multiple of 8, >=2 grid steps (v7x megacore), large enough to
    amortize the ~0.35us per-grid-step overhead, small enough that the (TB*N, feat)
    f32 intermediates stay at a few MiB (well under v7x's 64 MiB VMEM)."""
    cap = 256
    while cap > 8 and cap * N * feat * 4 > (4 << 20):
        cap //= 2
    nblocks = max(2, -(-B // cap))                      # at least 2 grid steps
    return max(8, min(cap, _round_up(-(-B // nblocks), 8)))


# ----------------------------------------------------------------------------
# Pallas kernel
# ----------------------------------------------------------------------------
def _hds_kernel(*refs, dims, segments, num_things, has_hidden, last_activation,
                aggregate):
    if has_hidden:
        (instr_ref, state_ref, hidden_ref, watt_ref, batt_ref,
         w1s_ref, w1h_ref, b1_ref, w2_ref, b2_ref,
         w3_ref, b3_ref, w4_ref, b4_ref, out_ref) = refs
    else:
        (instr_ref, state_ref, watt_ref, batt_ref,
         w1s_ref, b1_ref, w2_ref, b2_ref,
         w3_ref, b3_ref, w4_ref, b4_ref, out_ref) = refs
        hidden_ref = w1h_ref = None

    TB, N, D, H, HID, OUT = dims
    f32, bf16 = jnp.float32, jnp.bfloat16
    dot = functools.partial(jnp.dot, preferred_element_type=f32)

    def sigmoid(v):
        # exp + approx reciprocal both live on the EUP slot (free vs VPU/MXU)
        return pl.reciprocal(1.0 + jnp.exp(-v), approx=True)

    if last_activation == "relu":
        act = lambda v: jnp.maximum(v, 0.0)
    elif last_activation == "sigmoid":
        act = sigmoid
    else:
        raise NotImplementedError(last_activation)

    # --- fused instruction attentions: ONE lane-dense matmul, then static lane slices
    instr = instr_ref[...]                                           # (TB, I) bf16
    att_all = sigmoid(dot(instr, watt_ref[...]) + batt_ref[...])     # (TB, D+H+HID) f32
    att_s = att_all[:, :D]                                           # goal attention, state part
    att2 = att_all[:, D + H:D + H + HID]                             # second attention

    # --- goal attention * state, then scaler_layer Linear1 (state half), per sample
    x = state_ref[...].astype(f32)                                   # (TB, N, D)
    xs = (x * att_s[:, None, :]).astype(bf16).reshape(TB * N, D)
    t1 = dot(xs, w1s_ref[...])                                       # (TB*N, HID) f32

    if has_hidden:
        att_h = att_all[:, D:D + H]                                  # goal attention, hidden part
        hv = (hidden_ref[...].astype(f32) * att_h).astype(bf16)      # (TB, H)
        th = dot(hv, w1h_ref[...])                                   # (TB, HID)
        t1 = (t1.reshape(TB, N, HID) + th[:, None, :]).reshape(TB * N, HID)

    h1 = jnp.maximum(t1 + b1_ref[...], 0.0)                          # scaler_layer: Linear1 + ReLU
    h2 = act(dot(h1.astype(bf16), w2_ref[...]) + b2_ref[...])        # scaler_layer: Linear2 + act
    h2_3 = h2.reshape(TB, N, HID)

    w3, b3 = w3_ref[...], b3_ref[...]
    w4, b4 = w4_ref[...], b4_ref[...]

    # --- aggregate_by_thing (faithful `begin = i` indexing), second attention,
    #     second_scaler and the final aggregation over things, per unique slice.
    out_acc = jnp.zeros((TB, OUT), f32)
    for begin, count, mult in segments:
        a_t = jnp.sum(h2_3[:, begin:begin + count, :], axis=1)       # (TB, HID)
        if aggregate == "mean":
            a_t = a_t * (1.0 / count)
        g_t = (a_t * att2).astype(bf16)
        h3 = jnp.maximum(dot(g_t, w3) + b3, 0.0)                     # second_scaler: Linear1+ReLU
        h4 = act(dot(h3.astype(bf16), w4) + b4)                      # second_scaler: Linear2+act
        out_acc = out_acc + (h4 * float(mult) if mult > 1 else h4)
    if aggregate == "mean":
        out_acc = out_acc * (1.0 / num_things)

    out_ref[...] = out_acc.astype(out_ref.dtype)                     # lane-dense full-block store


# ----------------------------------------------------------------------------
# Wrapper
# ----------------------------------------------------------------------------
def hierarchical_deep_set_forward(params, state, instruction, hidden_state=None, *,
                                  aggregate="mean", last_activation="relu"):
    """Fused Pallas forward pass of HierarchicalDeepSet."""
    if aggregate not in ("mean", "sum"):
        # TODO(synk): aggregate='diff_or' needs an externally loaded torch sub-network
        # (params_or.pk); no in-script Pallas equivalent.
        raise NotImplementedError(aggregate)

    full_state = format_state(state)                         # (B, N, D) f32
    n_channels = get_number_of_channels(state)
    B, N, D = full_state.shape
    assert sum(n_channels) == N
    I = instruction.shape[1]
    has_hidden = hidden_state is not None
    H = hidden_state.shape[1] if has_hidden else 0

    wg, bg = params["goal_att_w"], params["goal_att_b"]      # (I, D+H), (D+H,)
    w1, b1 = params["scaler1_w1"], params["scaler1_b1"]      # (D+H, hid), (hid,)
    w2, b2 = params["scaler1_w2"], params["scaler1_b2"]      # (hid, hid), (hid,)
    wa2, ba2 = params["att2_w"], params["att2_b"]            # (I, hid), (hid,)
    w3, b3 = params["scaler2_w1"], params["scaler2_b1"]      # (hid, hid), (hid,)
    w4, b4 = params["scaler2_w2"], params["scaler2_b2"]      # (hid, out), (out,)
    HID = w2.shape[1]
    OUT = w4.shape[1]
    assert wg.shape[1] == D + H and w1.shape[0] == D + H

    # Batch tiling + zero padding: every grid block is full (no unspecified padded
    # rows can pollute valid outputs) and there are >= 2 grid steps for v7x.
    TB = _choose_batch_tile(B, N, max(D + H, HID, OUT))
    B_pad = max(_round_up(B, TB), 2 * TB)
    grid = (B_pad // TB,)

    bf16 = jnp.bfloat16

    def pad_rows(a, rows):
        a = jnp.asarray(a, jnp.float32)
        return jnp.pad(a, [(0, rows - a.shape[0])] + [(0, 0)] * (a.ndim - 1))

    instr_p = pad_rows(instruction, B_pad).astype(bf16)      # (B_pad, I)
    state_p = pad_rows(full_state, B_pad).astype(bf16)       # (B_pad, N, D)
    hidden_p = pad_rows(hidden_state, B_pad).astype(bf16) if has_hidden else None

    # Fuse the three instruction-attention projections into one lane-dense matmul.
    watt = jnp.concatenate([jnp.asarray(wg, jnp.float32),
                            jnp.asarray(wa2, jnp.float32)], axis=1).astype(bf16)  # (I, D+H+HID)
    batt = jnp.concatenate([jnp.asarray(bg, jnp.float32),
                            jnp.asarray(ba2, jnp.float32)]).reshape(1, -1)        # (1, D+H+HID)

    as_bf = lambda a: jnp.asarray(a, jnp.float32).astype(bf16)
    row = lambda a: jnp.asarray(a, jnp.float32).reshape(1, -1)     # biases as (1, K) lane rows

    w1s = as_bf(jnp.asarray(w1)[:D, :])                      # state half of first Linear
    w1h = as_bf(jnp.asarray(w1)[D:, :]) if has_hidden else None

    # Unique (begin, count) channel slices of aggregate_by_thing (keeping the original
    # `begin = i` indexing quirk) with multiplicities; identical things are computed
    # once and weighted — exact.
    seg_mult = {}
    begin = 0
    for c in n_channels:
        key = (begin, int(c))
        seg_mult[key] = seg_mult.get(key, 0) + 1
        begin = c          # NOTE: mirrors the original aggregate_by_thing (`begin = i`, not `+=`)
    segments = tuple((b, c, m) for (b, c), m in seg_mult.items())

    b2d = lambda b: (b, 0)
    b3d = lambda b: (b, 0, 0)
    fixed = lambda a: pl.BlockSpec(a.shape, lambda b, _nd=a.ndim: (0,) * _nd)

    inputs = [instr_p, state_p]
    in_specs = [pl.BlockSpec((TB, I), b2d),
                pl.BlockSpec((TB, N, D), b3d)]
    if has_hidden:
        inputs.append(hidden_p)
        in_specs.append(pl.BlockSpec((TB, H), b2d))

    def add_const(a):
        inputs.append(a)
        in_specs.append(fixed(a))

    add_const(watt); add_const(batt)
    add_const(w1s)
    if has_hidden:
        add_const(w1h)
    add_const(row(b1))
    add_const(as_bf(w2)); add_const(row(b2))
    add_const(as_bf(w3)); add_const(row(b3))
    add_const(as_bf(w4)); add_const(row(b4))

    kernel = functools.partial(_hds_kernel,
                               dims=(TB, N, D, H, HID, OUT),
                               segments=segments,
                               num_things=len(n_channels),
                               has_hidden=has_hidden,
                               last_activation=last_activation,
                               aggregate=aggregate)

    out = pl.pallas_call(
        kernel,
        out_shape=jax.ShapeDtypeStruct((B_pad, OUT), jnp.float32),
        grid=grid,
        in_specs=in_specs,
        out_specs=pl.BlockSpec((TB, OUT), b2d),
        compiler_params=pltpu.CompilerParams(
            dimension_semantics=("parallel",),    # batch blocks independent (2 TCs on v7x)
            vmem_limit_bytes=32 * 1024 * 1024),
    )(*inputs)
    return out[:B]


# ----------------------------------------------------------------------------
# Plain-JAX reference (mirrors the PyTorch forward, incl. the `begin = i` quirk)
# ----------------------------------------------------------------------------
def reference_forward(params, state, instruction, hidden_state=None, *,
                      aggregate="mean", last_activation="relu"):
    sig = lambda x: 1.0 / (1.0 + jnp.exp(-x))
    act = (lambda x: jnp.maximum(x, 0.0)) if last_activation == "relu" else sig

    full_state = format_state(state)
    n_channels = get_number_of_channels(state)
    B, N, _ = full_state.shape
    if hidden_state is not None:
        hrep = jnp.broadcast_to(hidden_state[:, None, :].astype(jnp.float32),
                                (B, N, hidden_state.shape[1]))
        full_state = jnp.concatenate([full_state, hrep], axis=2)
    att = sig(instruction @ params["goal_att_w"] + params["goal_att_b"])
    fs = att[:, None, :] * full_state
    fs = jnp.maximum(fs @ params["scaler1_w1"] + params["scaler1_b1"], 0.0)
    fs = act(fs @ params["scaler1_w2"] + params["scaler1_b2"])

    def agg_slice(x):
        return x.mean(axis=1) if aggregate == "mean" else x.sum(axis=1)

    aggs, begin = [], 0
    for c in n_channels:
        aggs.append(agg_slice(fs[:, begin:begin + c, :]))
        begin = c                      # mirrors the original aggregate_by_thing
    fs = jnp.stack(aggs, axis=1)
    att2 = sig(instruction @ params["att2_w"] + params["att2_b"])
    fs = att2[:, None, :] * fs
    fs = jnp.maximum(fs @ params["scaler2_w1"] + params["scaler2_b1"], 0.0)
    fs = act(fs @ params["scaler2_w2"] + params["scaler2_b2"])
    return agg_slice(fs)


def init_params(key, instruction_embedding, state_embedding, hidden_state_size,
                hidden_size, output_size):
    din = state_embedding + hidden_state_size
    ks = jax.random.split(key, 6)

    def lin(k, fan_in, fan_out):
        kw, kb = jax.random.split(k)
        lim = fan_in ** -0.5
        w = jax.random.uniform(kw, (fan_in, fan_out), jnp.float32, -lim, lim)
        b = jax.random.uniform(kb, (fan_out,), jnp.float32, -lim, lim)
        return w, b

    p = {}
    p["goal_att_w"], p["goal_att_b"] = lin(ks[0], instruction_embedding, din)
    p["scaler1_w1"], p["scaler1_b1"] = lin(ks[1], din, hidden_size)
    # HierarchicalDeepSet: first scaler's output_size is overridden to hidden_size
    p["scaler1_w2"], p["scaler1_b2"] = lin(ks[2], hidden_size, hidden_size)
    p["att2_w"], p["att2_b"] = lin(ks[3], instruction_embedding, hidden_size)
    p["scaler2_w1"], p["scaler2_b1"] = lin(ks[4], hidden_size, hidden_size)
    p["scaler2_w2"], p["scaler2_b2"] = lin(ks[5], hidden_size, output_size)
    return p


if __name__ == "__main__":
    key = jax.random.PRNGKey(0)
    ks = jax.random.split(key, 4)

    B = 2
    instruction_embedding = 32
    state_embedding = 32
    hidden_state_size = 32
    hidden_size = 64
    output_size = 32
    n_channels_per_thing = [4, 4, 4, 4]          # 4 "things", 4 channels each -> N = 16
    last_activation = "relu"

    # state: list (length B) of dicts thing -> (channels, state_embedding)
    state = []
    for b in range(B):
        d = {}
        for t_i, c in enumerate(n_channels_per_thing):
            kk = jax.random.fold_in(ks[0], b * 100 + t_i)
            d[f"thing_{t_i}"] = jax.random.normal(kk, (c, state_embedding), jnp.float32)
        state.append(d)
    instruction = jax.random.normal(ks[1], (B, instruction_embedding), jnp.float32)
    hidden_state = jax.random.normal(ks[2], (B, hidden_state_size), jnp.float32)

    params = init_params(ks[3], instruction_embedding, state_embedding,
                         hidden_state_size, hidden_size, output_size)

    out = hierarchical_deep_set_forward(params, state, instruction, hidden_state,
                                        aggregate="mean", last_activation=last_activation)
    out = jax.block_until_ready(out)

    ref = reference_forward(params, state, instruction, hidden_state,
                            aggregate="mean", last_activation=last_activation)

    assert out.shape == (B, output_size)
    # bf16 MXU operands (f32 accumulate) -> tolerance loosened vs pure-f32 reference.
    max_err = float(jnp.max(jnp.abs(out - ref)))
    assert bool(jnp.allclose(out, ref, atol=3e-2, rtol=3e-2)), ("mismatch", max_err)

    print("KERNEL_OK")
</pallas_src>

<mosaic_0001>
module attributes {stable_mosaic.version = 11 : i64} {
  func.func @_hds_kernel(%arg0: i32, %arg1: memref<8x32xbf16, #tpu.memory_space<vmem>>, %arg2: memref<8x16x32xbf16, #tpu.memory_space<vmem>>, %arg3: memref<8x32xbf16, #tpu.memory_space<vmem>>, %arg4: memref<32x128xbf16, #tpu.memory_space<vmem>>, %arg5: memref<1x128xf32, #tpu.memory_space<vmem>>, %arg6: memref<32x64xbf16, #tpu.memory_space<vmem>>, %arg7: memref<32x64xbf16, #tpu.memory_space<vmem>>, %arg8: memref<1x64xf32, #tpu.memory_space<vmem>>, %arg9: memref<64x64xbf16, #tpu.memory_space<vmem>>, %arg10: memref<1x64xf32, #tpu.memory_space<vmem>>, %arg11: memref<64x64xbf16, #tpu.memory_space<vmem>>, %arg12: memref<1x64xf32, #tpu.memory_space<vmem>>, %arg13: memref<64x32xbf16, #tpu.memory_space<vmem>>, %arg14: memref<1x32xf32, #tpu.memory_space<vmem>>, %arg15: memref<8x32xf32, #tpu.memory_space<vmem>>) attributes {dimension_semantics = [#tpu.dimension_semantics<parallel>], iteration_bounds = array<i64: 2>, scalar_prefetch = 0 : i64, scratch_operands = 0 : i64, tpu.core_type = #tpu.core_type<tc>, window_params = [{transform_indices = @transform_0, window_bounds = array<i64: 8, 32>}, {transform_indices = @transform_1, window_bounds = array<i64: 8, 16, 32>}, {transform_indices = @transform_2, window_bounds = array<i64: 8, 32>}, {pipeline_mode = #tpu.pipeline_mode<synchronous>, transform_indices = @transform_3, window_bounds = array<i64: 32, 128>}, {pipeline_mode = #tpu.pipeline_mode<synchronous>, transform_indices = @transform_4, window_bounds = array<i64: 1, 128>}, {pipeline_mode = #tpu.pipeline_mode<synchronous>, transform_indices = @transform_5, window_bounds = array<i64: 32, 64>}, {pipeline_mode = #tpu.pipeline_mode<synchronous>, transform_indices = @transform_6, window_bounds = array<i64: 32, 64>}, {pipeline_mode = #tpu.pipeline_mode<synchronous>, transform_indices = @transform_7, window_bounds = array<i64: 1, 64>}, {pipeline_mode = #tpu.pipeline_mode<synchronous>, transform_indices = @transform_8, window_bounds = array<i64: 64, 64>}, {pipeline_mode = #tpu.pipeline_mode<synchronous>, transform_indices = @transform_9, window_bounds = array<i64: 1, 64>}, {pipeline_mode = #tpu.pipeline_mode<synchronous>, transform_indices = @transform_10, window_bounds = array<i64: 64, 64>}, {pipeline_mode = #tpu.pipeline_mode<synchronous>, transform_indices = @transform_11, window_bounds = array<i64: 1, 64>}, {pipeline_mode = #tpu.pipeline_mode<synchronous>, transform_indices = @transform_12, window_bounds = array<i64: 64, 32>}, {pipeline_mode = #tpu.pipeline_mode<synchronous>, transform_indices = @transform_13, window_bounds = array<i64: 1, 32>}, {transform_indices = @transform_14, window_bounds = array<i64: 8, 32>}]} {
    %c0 = arith.constant 0 : index
    %c0_0 = arith.constant 0 : index
    %0 = vector.load %arg1[%c0, %c0_0] : memref<8x32xbf16, #tpu.memory_space<vmem>>, vector<8x32xbf16>
    %c0_1 = arith.constant 0 : index
    %c0_2 = arith.constant 0 : index
    %1 = vector.load %arg4[%c0_1, %c0_2] : memref<32x128xbf16, #tpu.memory_space<vmem>>, vector<32x128xbf16>
    %cst = arith.constant dense<0.000000e+00> : vector<8x128xf32>
    %2 = tpu.matmul %0, %1, %cst {dimension_numbers = #tpu.dot_dimension_numbers<[1], [0], [0], [1], [0, 0, 1, 1], [], []>} : vector<8x32xbf16>, vector<32x128xbf16>, vector<8x128xf32> -> vector<8x128xf32>
    %c0_3 = arith.constant 0 : index
    %c0_4 = arith.constant 0 : index
    %3 = vector.load %arg5[%c0_3, %c0_4] : memref<1x128xf32, #tpu.memory_space<vmem>>, vector<1x128xf32>
    %4 = vector.broadcast %3 : vector<1x128xf32> to vector<8x128xf32>
    %5 = arith.addf %2, %4 : vector<8x128xf32>
    %cst_5 = arith.constant 0.000000e+00 : f32
    %6 = vector.broadcast %cst_5 : f32 to vector<8x128xf32>
    %7 = arith.subf %6, %5 : vector<8x128xf32>
    %8 = math.exp %7 : vector<8x128xf32>
    %cst_6 = arith.constant 1.000000e+00 : f32
    %9 = vector.broadcast %cst_6 : f32 to vector<8x128xf32>
    %10 = arith.addf %9, %8 : vector<8x128xf32>
    %11 = tpu.reciprocal %10 {approx = true} : vector<8x128xf32> -> vector<8x128xf32>
    %12 = vector.extract_strided_slice %11 {offsets = [0, 0], sizes = [8, 32], strides = [1, 1]} : vector<8x128xf32> to vector<8x32xf32>
    %13 = vector.extract_strided_slice %11 {offsets = [0, 64], sizes = [8, 64], strides = [1, 1]} : vector<8x128xf32> to vector<8x64xf32>
    %c0_7 = arith.constant 0 : index
    %c0_8 = arith.constant 0 : index
    %c0_9 = arith.constant 0 : index
    %14 = vector.load %arg2[%c0_7, %c0_8, %c0_9] : memref<8x16x32xbf16, #tpu.memory_space<vmem>>, vector<8x16x32xbf16>
    %15 = arith.extf %14 : vector<8x16x32xbf16> to vector<8x16x32xf32>
    %16 = vector.shape_cast %12 : vector<8x32xf32> to vector<8x1x32xf32>
    %17 = vector.broadcast %16 : vector<8x1x32xf32> to vector<8x16x32xf32>
    %18 = arith.mulf %15, %17 : vector<8x16x32xf32>
    %19 = arith.truncf %18 : vector<8x16x32xf32> to vector<8x16x32xbf16>
    %20 = vector.shape_cast %19 : vector<8x16x32xbf16> to vector<128x32xbf16>
    %c0_10 = arith.constant 0 : index
    %c0_11 = arith.constant 0 : index
    %21 = vector.load %arg6[%c0_10, %c0_11] : memref<32x64xbf16, #tpu.memory_space<vmem>>, vector<32x64xbf16>
    %cst_12 = arith.constant dense<0.000000e+00> : vector<128x64xf32>
    %22 = tpu.matmul %20, %21, %cst_12 {dimension_numbers = #tpu.dot_dimension_numbers<[1], [0], [0], [1], [0, 0, 1, 1], [], []>} : vector<128x32xbf16>, vector<32x64xbf16>, vector<128x64xf32> -> vector<128x64xf32>
    %23 = vector.extract_strided_slice %11 {offsets = [0, 32], sizes = [8, 32], strides = [1, 1]} : vector<8x128xf32> to vector<8x32xf32>
    %c0_13 = arith.constant 0 : index
    %c0_14 = arith.constant 0 : index
    %24 = vector.load %arg3[%c0_13, %c0_14] : memref<8x32xbf16, #tpu.memory_space<vmem>>, vector<8x32xbf16>
    %25 = arith.extf %24 : vector<8x32xbf16> to vector<8x32xf32>
    %26 = arith.mulf %25, %23 : vector<8x32xf32>
    %27 = arith.truncf %26 : vector<8x32xf32> to vector<8x32xbf16>
    %c0_15 = arith.constant 0 : index
    %c0_16 = arith.constant 0 : index
    %28 = vector.load %arg7[%c0_15, %c0_16] : memref<32x64xbf16, #tpu.memory_space<vmem>>, vector<32x64xbf16>
    %cst_17 = arith.constant dense<0.000000e+00> : vector<8x64xf32>
    %29 = tpu.matmul %27, %28, %cst_17 {dimension_numbers = #tpu.dot_dimension_numbers<[1], [0], [0], [1], [0, 0, 1, 1], [], []>} : vector<8x32xbf16>, vector<32x64xbf16>, vector<8x64xf32> -> vector<8x64xf32>
    %30 = vector.shape_cast %22 : vector<128x64xf32> to vector<8x16x64xf32>
    %31 = vector.shape_cast %29 : vector<8x64xf32> to vector<8x1x64xf32>
    %32 = vector.broadcast %31 : vector<8x1x64xf32> to vector<8x16x64xf32>
    %33 = arith.addf %30, %32 : vector<8x16x64xf32>
    %34 = vector.shape_cast %33 : vector<8x16x64xf32> to vector<128x64xf32>
    %c0_18 = arith.constant 0 : index
    %c0_19 = arith.constant 0 : index
    %35 = vector.load %arg8[%c0_18, %c0_19] : memref<1x64xf32, #tpu.memory_space<vmem>>, vector<1x64xf32>
    %36 = vector.broadcast %35 : vector<1x64xf32> to vector<128x64xf32>
    %37 = arith.addf %34, %36 : vector<128x64xf32>
    %cst_20 = arith.constant 0.000000e+00 : f32
    %38 = vector.broadcast %cst_20 : f32 to vector<128x64xf32>
    %39 = arith.maximumf %37, %38 : vector<128x64xf32>
    %40 = arith.truncf %39 : vector<128x64xf32> to vector<128x64xbf16>
    %c0_21 = arith.constant 0 : index
    %c0_22 = arith.constant 0 : index
    %41 = vector.load %arg9[%c0_21, %c0_22] : memref<64x64xbf16, #tpu.memory_space<vmem>>, vector<64x64xbf16>
    %cst_23 = arith.constant dense<0.000000e+00> : vector<128x64xf32>
    %42 = tpu.matmul %40, %41, %cst_23 {dimension_numbers = #tpu.dot_dimension_numbers<[1], [0], [0], [1], [0, 0, 1, 1], [], []>} : vector<128x64xbf16>, vector<64x64xbf16>, vector<128x64xf32> -> vector<128x64xf32>
    %c0_24 = arith.constant 0 : index
    %c0_25 = arith.constant 0 : index
    %43 = vector.load %arg10[%c0_24, %c0_25] : memref<1x64xf32, #tpu.memory_space<vmem>>, vector<1x64xf32>
    %44 = vector.broadcast %43 : vector<1x64xf32> to vector<128x64xf32>
    %45 = arith.addf %42, %44 : vector<128x64xf32>
    %cst_26 = arith.constant 0.000000e+00 : f32
    %46 = vector.broadcast %cst_26 : f32 to vector<128x64xf32>
    %47 = arith.maximumf %45, %46 : vector<128x64xf32>
    %48 = vector.shape_cast %47 : vector<128x64xf32> to vector<8x16x64xf32>
    %c0_27 = arith.constant 0 : index
    %c0_28 = arith.constant 0 : index
    %49 = vector.load %arg11[%c0_27, %c0_28] : memref<64x64xbf16, #tpu.memory_space<vmem>>, vector<64x64xbf16>
    %c0_29 = arith.constant 0 : index
    %c0_30 = arith.constant 0 : index
    %50 = vector.load %arg12[%c0_29, %c0_30] : memref<1x64xf32, #tpu.memory_space<vmem>>, vector<1x64xf32>
    %c0_31 = arith.constant 0 : index
    %c0_32 = arith.constant 0 : index
    %51 = vector.load %arg13[%c0_31, %c0_32] : memref<64x32xbf16, #tpu.memory_space<vmem>>, vector<64x32xbf16>
    %c0_33 = arith.constant 0 : index
    %c0_34 = arith.constant 0 : index
    %52 = vector.load %arg14[%c0_33, %c0_34] : memref<1x32xf32, #tpu.memory_space<vmem>>, vector<1x32xf32>
    %cst_35 = arith.constant 0.000000e+00 : f32
    %53 = vector.broadcast %cst_35 : f32 to vector<8x32xf32>
    %54 = vector.extract_strided_slice %48 {offsets = [0, 0, 0], sizes = [8, 4, 64], strides = [1, 1, 1]} : vector<8x16x64xf32> to vector<8x4x64xf32>
    %cst_36 = arith.constant dense<0.000000e+00> : vector<8x64xf32>
    %55 = vector.multi_reduction <add>, %54, %cst_36 [1] : vector<8x4x64xf32> to vector<8x64xf32>
    %cst_37 = arith.constant 2.500000e-01 : f32
    %56 = vector.broadcast %cst_37 : f32 to vector<8x64xf32>
    %57 = arith.mulf %55, %56 : vector<8x64xf32>
    %58 = arith.mulf %57, %13 : vector<8x64xf32>
    %59 = arith.truncf %58 : vector<8x64xf32> to vector<8x64xbf16>
    %cst_38 = arith.constant dense<0.000000e+00> : vector<8x64xf32>
    %60 = tpu.matmul %59, %49, %cst_38 {dimension_numbers = #tpu.dot_dimension_numbers<[1], [0], [0], [1], [0, 0, 1, 1], [], []>} : vector<8x64xbf16>, vector<64x64xbf16>, vector<8x64xf32> -> vector<8x64xf32>
    %61 = vector.broadcast %50 : vector<1x64xf32> to vector<8x64xf32>
    %62 = arith.addf %60, %61 : vector<8x64xf32>
    %cst_39 = arith.constant 0.000000e+00 : f32
    %63 = vector.broadcast %cst_39 : f32 to vector<8x64xf32>
    %64 = arith.maximumf %62, %63 : vector<8x64xf32>
    %65 = arith.truncf %64 : vector<8x64xf32> to vector<8x64xbf16>
    %cst_40 = arith.constant dense<0.000000e+00> : vector<8x32xf32>
    %66 = tpu.matmul %65, %51, %cst_40 {dimension_numbers = #tpu.dot_dimension_numbers<[1], [0], [0], [1], [0, 0, 1, 1], [], []>} : vector<8x64xbf16>, vector<64x32xbf16>, vector<8x32xf32> -> vector<8x32xf32>
    %67 = vector.broadcast %52 : vector<1x32xf32> to vector<8x32xf32>
    %68 = arith.addf %66, %67 : vector<8x32xf32>
    %cst_41 = arith.constant 0.000000e+00 : f32
    %69 = vector.broadcast %cst_41 : f32 to vector<8x32xf32>
    %70 = arith.maximumf %68, %69 : vector<8x32xf32>
    %71 = arith.addf %53, %70 : vector<8x32xf32>
    %72 = vector.extract_strided_slice %48 {offsets = [0, 4, 0], sizes = [8, 4, 64], strides = [1, 1, 1]} : vector<8x16x64xf32> to vector<8x4x64xf32>
    %cst_42 = arith.constant dense<0.000000e+00> : vector<8x64xf32>
    %73 = vector.multi_reduction <add>, %72, %cst_42 [1] : vector<8x4x64xf32> to vector<8x64xf32>
    %cst_43 = arith.constant 2.500000e-01 : f32
    %74 = vector.broadcast %cst_43 : f32 to vector<8x64xf32>
    %75 = arith.mulf %73, %74 : vector<8x64xf32>
    %76 = arith.mulf %75, %13 : vector<8x64xf32>
    %77 = arith.truncf %76 : vector<8x64xf32> to vector<8x64xbf16>
    %cst_44 = arith.constant dense<0.000000e+00> : vector<8x64xf32>
    %78 = tpu.matmul %77, %49, %cst_44 {dimension_numbers = #tpu.dot_dimension_numbers<[1], [0], [0], [1], [0, 0, 1, 1], [], []>} : vector<8x64xbf16>, vector<64x64xbf16>, vector<8x64xf32> -> vector<8x64xf32>
    %79 = vector.broadcast %50 : vector<1x64xf32> to vector<8x64xf32>
    %80 = arith.addf %78, %79 : vector<8x64xf32>
    %cst_45 = arith.constant 0.000000e+00 : f32
    %81 = vector.broadcast %cst_45 : f32 to vector<8x64xf32>
    %82 = arith.maximumf %80, %81 : vector<8x64xf32>
    %83 = arith.truncf %82 : vector<8x64xf32> to vector<8x64xbf16>
    %cst_46 = arith.constant dense<0.000000e+00> : vector<8x32xf32>
    %84 = tpu.matmul %83, %51, %cst_46 {dimension_numbers = #tpu.dot_dimension_numbers<[1], [0], [0], [1], [0, 0, 1, 1], [], []>} : vector<8x64xbf16>, vector<64x32xbf16>, vector<8x32xf32> -> vector<8x32xf32>
    %85 = vector.broadcast %52 : vector<1x32xf32> to vector<8x32xf32>
    %86 = arith.addf %84, %85 : vector<8x32xf32>
    %cst_47 = arith.constant 0.000000e+00 : f32
    %87 = vector.broadcast %cst_47 : f32 to vector<8x32xf32>
    %88 = arith.maximumf %86, %87 : vector<8x32xf32>
    %cst_48 = arith.constant 3.000000e+00 : f32
    %89 = vector.broadcast %cst_48 : f32 to vector<8x32xf32>
    %90 = arith.mulf %88, %89 : vector<8x32xf32>
    %91 = arith.addf %71, %90 : vector<8x32xf32>
    %cst_49 = arith.constant 2.500000e-01 : f32
    %92 = vector.broadcast %cst_49 : f32 to vector<8x32xf32>
    %93 = arith.mulf %91, %92 : vector<8x32xf32>
    %c0_50 = arith.constant 0 : index
    %c0_51 = arith.constant 0 : index
    %94 = vector.load %arg15[%c0_50, %c0_51] : memref<8x32xf32, #tpu.memory_space<vmem>>, vector<8x32xf32>
    tpu.vector_store %arg15[%c0_50, %c0_51], %93 {strides = array<i32>} : memref<8x32xf32, #tpu.memory_space<vmem>>, vector<8x32xf32>,
    return
  }
  func.func @transform_0(%arg0: i32) -> (i32, i32) {
    %c0_i32 = arith.constant 0 : i32
    %c0_i32_0 = arith.constant 0 : i32
    return %arg0, %c0_i32 : i32, i32
  }
  func.func @transform_1(%arg0: i32) -> (i32, i32, i32) {
    %c0_i32 = arith.constant 0 : i32
    %c0_i32_0 = arith.constant 0 : i32
    %c0_i32_1 = arith.constant 0 : i32
    return %arg0, %c0_i32, %c0_i32_0 : i32, i32, i32
  }
  func.func @transform_2(%arg0: i32) -> (i32, i32) {
    %c0_i32 = arith.constant 0 : i32
    %c0_i32_0 = arith.constant 0 : i32
    return %arg0, %c0_i32 : i32, i32
  }
  func.func @transform_3(%arg0: i32) -> (i32, i32) {
    %c0_i32 = arith.constant 0 : i32
    %c0_i32_0 = arith.constant 0 : i32
    %c0_i32_1 = arith.constant 0 : i32
    return %c0_i32, %c0_i32_0 : i32, i32
  }
  func.func @transform_4(%arg0: i32) -> (i32, i32) {
    %c0_i32 = arith.constant 0 : i32
    %c0_i32_0 = arith.constant 0 : i32
    %c0_i32_1 = arith.constant 0 : i32
    return %c0_i32, %c0_i32_0 : i32, i32
  }
  func.func @transform_5(%arg0: i32) -> (i32, i32) {
    %c0_i32 = arith.constant 0 : i32
    %c0_i32_0 = arith.constant 0 : i32
    %c0_i32_1 = arith.constant 0 : i32
    return %c0_i32, %c0_i32_0 : i32, i32
  }
  func.func @transform_6(%arg0: i32) -> (i32, i32) {
    %c0_i32 = arith.constant 0 : i32
    %c0_i32_0 = arith.constant 0 : i32
    %c0_i32_1 = arith.constant 0 : i32
    return %c0_i32, %c0_i32_0 : i32, i32
  }
  func.func @transform_7(%arg0: i32) -> (i32, i32) {
    %c0_i32 = arith.constant 0 : i32
    %c0_i32_0 = arith.constant 0 : i32
    %c0_i32_1 = arith.constant 0 : i32
    return %c0_i32, %c0_i32_0 : i32, i32
  }
  func.func @transform_8(%arg0: i32) -> (i32, i32) {
    %c0_i32 = arith.constant 0 : i32
    %c0_i32_0 = arith.constant 0 : i32
    %c0_i32_1 = arith.constant 0 : i32
    return %c0_i32, %c0_i32_0 : i32, i32
  }
  func.func @transform_9(%arg0: i32) -> (i32, i32) {
    %c0_i32 = arith.constant 0 : i32
    %c0_i32_0 = arith.constant 0 : i32
    %c0_i32_1 = arith.constant 0 : i32
    return %c0_i32, %c0_i32_0 : i32, i32
  }
  func.func @transform_10(%arg0: i32) -> (i32, i32) {
    %c0_i32 = arith.constant 0 : i32
    %c0_i32_0 = arith.constant 0 : i32
    %c0_i32_1 = arith.constant 0 : i32
    return %c0_i32, %c0_i32_0 : i32, i32
  }
  func.func @transform_11(%arg0: i32) -> (i32, i32) {
    %c0_i32 = arith.constant 0 : i32
    %c0_i32_0 = arith.constant 0 : i32
    %c0_i32_1 = arith.constant 0 : i32
    return %c0_i32, %c0_i32_0 : i32, i32
  }
  func.func @transform_12(%arg0: i32) -> (i32, i32) {
    %c0_i32 = arith.constant 0 : i32
    %c0_i32_0 = arith.constant 0 : i32
    %c0_i32_1 = arith.constant 0 : i32
    return %c0_i32, %c0_i32_0 : i32, i32
  }
  func.func @transform_13(%arg0: i32) -> (i32, i32) {
    %c0_i32 = arith.constant 0 : i32
    %c0_i32_0 = arith.constant 0 : i32
    %c0_i32_1 = arith.constant 0 : i32
    return %c0_i32, %c0_i32_0 : i32, i32
  }
  func.func @transform_14(%arg0: i32) -> (i32, i32) {
    %c0_i32 = arith.constant 0 : i32
    %c0_i32_0 = arith.constant 0 : i32
    return %arg0, %c0_i32 : i32, i32
  }
}

</mosaic_0001>

<llo_original>
// kernel: tpu_custom_call.1
$region0: #{tpu_custom_call.1}
  #allocation0 [shape = 'u32[]', space=smem, size = 0x4, offset = 0x4, fixed_abs, tag = 'smem constant byte address 0x4 - core index']
  #allocation1 [shape = 'u32[72,128]{1,0:T(1,128)}', space=vmem, size = 0x9000, scoped, tag = 'internal scratch']
  %s0 = inlined_call_operand.hbm [shape: bf16[16,32], index: 0, kind: input, shape index: {}]
  %s1 = inlined_call_operand.hbm [shape: bf16[16,16,32], index: 1, kind: input, shape index: {}]
  %s2 = inlined_call_operand.hbm [shape: bf16[16,32], index: 2, kind: input, shape index: {}]
  %s3 = inlined_call_operand.vmem [shape: bf16[32,128], index: 3, kind: input, shape index: {}]
  %s4 = inlined_call_operand.vmem [shape: f32[1,128], index: 4, kind: input, shape index: {}]
  %s5 = inlined_call_operand.hbm [shape: bf16[32,64], index: 5, kind: input, shape index: {}]
  %s6 = inlined_call_operand.hbm [shape: bf16[32,64], index: 6, kind: input, shape index: {}]
  %s7 = inlined_call_operand.vmem [shape: f32[1,64], index: 7, kind: input, shape index: {}]
  %s8 = inlined_call_operand.vmem [shape: bf16[64,64], index: 8, kind: input, shape index: {}]
  %s9 = inlined_call_operand.vmem [shape: f32[1,64], index: 9, kind: input, shape index: {}]
  %s10 = inlined_call_operand.hbm [shape: bf16[64,64], index: 10, kind: input, shape index: {}]
  %s11 = inlined_call_operand.vmem [shape: f32[1,64], index: 11, kind: input, shape index: {}]
  %s12 = inlined_call_operand.vmem [shape: bf16[64,32], index: 12, kind: input, shape index: {}]
  %s13 = inlined_call_operand.vmem [shape: f32[1,32], index: 13, kind: input, shape index: {}]
  %s14 = inlined_call_operand.hbm [shape: f32[16,32], index: 14, kind: output, shape index: {}]
  %s15 = sld [smem:[#allocation0]]
  $region113: #{tpu_custom_call.1} parent=0
    _
  %s17 = ssub.s32 1, %s15
  %s18 = scalar_select 0, %s17, %s15
  $region1: #{tpu_custom_call.1} parent=0
    #allocation2 [shape = 'u8[4096]{0}', space=vmem, size = 0x1000, scoped, tag = 'input window, operand 0']
    #allocation3 [shape = 's32[2]{0}', space=sflag, size = 0x8, scoped, tag = 'scoped memory for tpu_custom_call.1']
    #allocation4 [shape = 's32[2]{0}', space=sflag, size = 0x8, scoped, tag = 'scoped memory for tpu_custom_call.1']
    #allocation5 [shape = 'u8[65536]{0}', space=vmem, size = 0x10000, scoped, tag = 'input window, operand 1']
    #allocation6 [shape = 's32[2]{0}', space=sflag, size = 0x8, scoped, tag = 'scoped memory for tpu_custom_call.1']
    #allocation7 [shape = 'u8[4096]{0}', space=vmem, size = 0x1000, scoped, tag = 'input window, operand 2']
    #allocation8 [shape = 'u8[8192]{0}', space=vmem, size = 0x2000, scoped, tag = 'input window, operand 5, single buffered']
    #allocation9 [shape = 's32[1]{0}', space=sflag, size = 0x4, scoped, tag = 'scoped memory for tpu_custom_call.1']
    #allocation10 [shape = 'u8[8192]{0}', space=vmem, size = 0x2000, scoped, tag = 'input window, operand 6, single buffered']
    #allocation11 [shape = 'u8[16384]{0}', space=vmem, size = 0x4000, scoped, tag = 'input window, operand 10, single buffered']
    #allocation12 [shape = 's32[1]{0}', space=sflag, size = 0x4, scoped, tag = 'scoped memory for tpu_custom_call.1']
    #allocation13 [shape = 'u8[8192]{0}', space=vmem, size = 0x2000, scoped, tag = 'output window, operand 0']
    %19 = vsyncpa [#allocation3], 0
    %s20 = scalar_lea.sflag [#allocation3], 1
    %21 = vsyncpa %s20, 0
    %22 = vsyncpa [#allocation6], 0
    %s23 = scalar_lea.sflag [#allocation6], 1
    %24 = vsyncpa %s23, 0
    %25 = vsyncpa [#allocation9], 0
    %26 = vsyncpa [#allocation12], 0
    %27 = vsyncpa [#allocation4], 0
    %s28 = scalar_lea.sflag [#allocation4], 1
    %29 = vsyncpa %s28, 0
    loop: start=0, step=1, limit=4
    $region2: #{tpu_custom_call.1} parent=1 // loop_pre_header
      _
    $region3: #{tpu_custom_call.1} parent=1 // loop_header
      %s31 = sphi 0, %s35
      %p32 = scmp.ge.s32.totalorder %s31, 4
      %s41 = sphi 0, %s43
      %s44 = sphi 0, %s41
      %s45 = sphi 0, %s44
      %s61 = sphi 0, %s45
      %s67 = sphi 0, %s69
      %s70 = sphi 0, %s67
      %s71 = sphi 0, %s70
      %s87 = sphi 0, %s71
      %s93 = sphi 0, %s95
      %s96 = sphi 0, %s93
      %s97 = sphi 0, %s96
      %s113 = sphi 0, %s97
      %s117 = sphi 0, %s117
      %s119 = sphi 0, %s117
      %s120 = sphi 0, %s119
      %s134 = sphi 0, %s120
      %s138 = sphi 0, %s138
      %s140 = sphi 0, %s138
      %s141 = sphi 0, %s140
      %s155 = sphi 0, %s141
      %s159 = sphi 0, %s159
      %s161 = sphi 0, %s159
      %s162 = sphi 0, %s161
      %s176 = sphi 0, %s162
      %s180 = sphi 0, %s180
      %s182 = sphi 0, %s180
      %s183 = sphi 0, %s182
      %s197 = sphi 0, %s183
      %s201 = sphi 0, %s201
      %s203 = sphi 0, %s201
      %s204 = sphi 0, %s203
      %s218 = sphi 0, %s204
      %s222 = sphi 0, %s222
      %s224 = sphi 0, %s222
      %s225 = sphi 0, %s224
      %s239 = sphi 0, %s225
      %s243 = sphi 0, %s243
      %s245 = sphi 0, %s243
      %s246 = sphi 0, %s245
      %s260 = sphi 0, %s246
      %s264 = sphi 0, %s264
      %s266 = sphi 0, %s264
      %s267 = sphi 0, %s266
      %s281 = sphi 0, %s267
      %s285 = sphi 0, %s285
      %s287 = sphi 0, %s285
      %s288 = sphi 0, %s287
      %s302 = sphi 0, %s288
      %s306 = sphi 0, %s306
      %s308 = sphi 0, %s306
      %s309 = sphi 0, %s308
      %s323 = sphi 0, %s309
      %s327 = sphi 0, %s327
      %s329 = sphi 0, %s327
      %s330 = sphi 0, %s329
      %s344 = sphi 0, %s330
      %s350 = sphi 0, %s352
      %s353 = sphi 0, %s350
      %s354 = sphi 0, %s353
      %s370 = sphi 0, %s354
    $region4: #{tpu_custom_call.1} parent=1 // loop_header_branch
      %34 = sbr.rel (%p32) target = $region8
    $region5: #{tpu_custom_call.1} parent=1 // loop_body
      %s36 = ssub.s32 %s31, 1
      %s37 = ssub.s32 %s31, 2
      %s38 = sadd.s32 %s31, 1
      %s39 = ssub.s32 %s31, %s38
      %p40 = scmp.eq.s32.totalorder %s39, 0
      %s42 = sadd.s32 %s41, 1
      %s43 = scalar_select %p40, %s41, %s42
      %p46 = pneg %p40
      %p47 = scmp.eq.s32.totalorder %s31, 1
      %p48 = por %p46, %p47
      %p49 = scmp.ne.s32.totalorder %s41, %s44
      %p50 = scmp.eq.s32.totalorder %s31, 0
      %p51 = por %p49, %p50
      %p52 = scmp.ne.s32.totalorder %s41, %s44
      %p53 = scmp.eq.s32.totalorder %s36, 1
      %p54 = por %p52, %p53
      %p55 = scmp.ne.s32.totalorder %s44, %s45
      %p56 = scmp.eq.s32.totalorder %s36, 0
      %p57 = por %p55, %p56
      %p58 = scmp.ne.s32.totalorder %s44, %s45
      %p59 = scmp.eq.s32.totalorder %s37, 1
      %p60 = por %p58, %p59
      %p62 = scmp.ne.s32.totalorder %s45, %s61
      %p63 = scmp.eq.s32.totalorder %s37, 0
      %p64 = por %p62, %p63
      %s65 = ssub.s32 %s31, %s38
      %p66 = scmp.eq.s32.totalorder %s65, 0
      %s68 = sadd.s32 %s67, 1
      %s69 = scalar_select %p66, %s67, %s68
      %p72 = pneg %p66
      %p73 = scmp.eq.s32.totalorder %s31, 1
      %p74 = por %p72, %p73
      %p75 = scmp.ne.s32.totalorder %s67, %s70
      %p76 = scmp.eq.s32.totalorder %s31, 0
      %p77 = por %p75, %p76
      %p78 = scmp.ne.s32.totalorder %s67, %s70
      %p79 = scmp.eq.s32.totalorder %s36, 1
      %p80 = por %p78, %p79
      %p81 = scmp.ne.s32.totalorder %s70, %s71
      %p82 = scmp.eq.s32.totalorder %s36, 0
      %p83 = por %p81, %p82
      %p84 = scmp.ne.s32.totalorder %s70, %s71
      %p85 = scmp.eq.s32.totalorder %s37, 1
      %p86 = por %p84, %p85
      %p88 = scmp.ne.s32.totalorder %s71, %s87
      %p89 = scmp.eq.s32.totalorder %s37, 0
      %p90 = por %p88, %p89
      %s91 = ssub.s32 %s31, %s38
      %p92 = scmp.eq.s32.totalorder %s91, 0
      %s94 = sadd.s32 %s93, 1
      %s95 = scalar_select %p92, %s93, %s94
      %p98 = pneg %p92
      %p99 = scmp.eq.s32.totalorder %s31, 1
      %p100 = por %p98, %p99
      %p101 = scmp.ne.s32.totalorder %s93, %s96
      %p102 = scmp.eq.s32.totalorder %s31, 0
      %p103 = por %p101, %p102
      %p104 = scmp.ne.s32.totalorder %s93, %s96
      %p105 = scmp.eq.s32.totalorder %s36, 1
      %p106 = por %p104, %p105
      %p107 = scmp.ne.s32.totalorder %s96, %s97
      %p108 = scmp.eq.s32.totalorder %s36, 0
      %p109 = por %p107, %p108
      %p110 = scmp.ne.s32.totalorder %s96, %s97
      %p111 = scmp.eq.s32.totalorder %s37, 1
      %p112 = por %p110, %p111
      %p114 = scmp.ne.s32.totalorder %s97, %s113
      %p115 = scmp.eq.s32.totalorder %s37, 0
      %p116 = por %p114, %p115
      %s118 = sadd.s32 %s117, 1
      %p121 = scmp.eq.s32.totalorder %s31, 1
      %p122 = scmp.ne.s32.totalorder %s117, %s119
      %p123 = scmp.eq.s32.totalorder %s31, 0
      %p124 = por %p122, %p123
      %p125 = scmp.ne.s32.totalorder %s117, %s119
      %p126 = scmp.eq.s32.totalorder %s36, 1
      %p127 = por %p125, %p126
      %p128 = scmp.ne.s32.totalorder %s119, %s120
      %p129 = scmp.eq.s32.totalorder %s36, 0
      %p130 = por %p128, %p129
      %p131 = scmp.ne.s32.totalorder %s119, %s120
      %p132 = scmp.eq.s32.totalorder %s37, 1
      %p133 = por %p131, %p132
      %p135 = scmp.ne.s32.totalorder %s120, %s134
      %p136 = scmp.eq.s32.totalorder %s37, 0
      %p137 = por %p135, %p136
      %s139 = sadd.s32 %s138, 1
      %p142 = scmp.eq.s32.totalorder %s31, 1
      %p143 = scmp.ne.s32.totalorder %s138, %s140
      %p144 = scmp.eq.s32.totalorder %s31, 0
      %p145 = por %p143, %p144
      %p146 = scmp.ne.s32.totalorder %s138, %s140
      %p147 = scmp.eq.s32.totalorder %s36, 1
      %p148 = por %p146, %p147
      %p149 = scmp.ne.s32.totalorder %s140, %s141
      %p150 = scmp.eq.s32.totalorder %s36, 0
      %p151 = por %p149, %p150
      %p152 = scmp.ne.s32.totalorder %s140, %s141
      %p153 = scmp.eq.s32.totalorder %s37, 1
      %p154 = por %p152, %p153
      %p156 = scmp.ne.s32.totalorder %s141, %s155
      %p157 = scmp.eq.s32.totalorder %s37, 0
      %p158 = por %p156, %p157
      %s160 = sadd.s32 %s159, 1
      %p163 = scmp.eq.s32.totalorder %s31, 1
      %p164 = scmp.ne.s32.totalorder %s159, %s161
      %p165 = scmp.eq.s32.totalorder %s31, 0
      %p166 = por %p164, %p165
      %p167 = scmp.ne.s32.totalorder %s159, %s161
      %p168 = scmp.eq.s32.totalorder %s36, 1
      %p169 = por %p167, %p168
      %p170 = scmp.ne.s32.totalorder %s161, %s162
      %p171 = scmp.eq.s32.totalorder %s36, 0
      %p172 = por %p170, %p171
      %p173 = scmp.ne.s32.totalorder %s161, %s162
      %p174 = scmp.eq.s32.totalorder %s37, 1
      %p175 = por %p173, %p174
      %p177 = scmp.ne.s32.totalorder %s162, %s176
      %p178 = scmp.eq.s32.totalorder %s37, 0
      %p179 = por %p177, %p178
      %s181 = sadd.s32 %s180, 1
      %p184 = scmp.eq.s32.totalorder %s31, 1
      %p185 = scmp.ne.s32.totalorder %s180, %s182
      %p186 = scmp.eq.s32.totalorder %s31, 0
      %p187 = por %p185, %p186
      %p188 = scmp.ne.s32.totalorder %s180, %s182
      %p189 = scmp.eq.s32.totalorder %s36, 1
      %p190 = por %p188, %p189
      %p191 = scmp.ne.s32.totalorder %s182, %s183
      %p192 = scmp.eq.s32.totalorder %s36, 0
      %p193 = por %p191, %p192
      %p194 = scmp.ne.s32.totalorder %s182, %s183
      %p195 = scmp.eq.s32.totalorder %s37, 1
      %p196 = por %p194, %p195
      %p198 = scmp.ne.s32.totalorder %s183, %s197
      %p199 = scmp.eq.s32.totalorder %s37, 0
      %p200 = por %p198, %p199
      %s202 = sadd.s32 %s201, 1
      %p205 = scmp.eq.s32.totalorder %s31, 1
      %p206 = scmp.ne.s32.totalorder %s201, %s203
      %p207 = scmp.eq.s32.totalorder %s31, 0
      %p208 = por %p206, %p207
      %p209 = scmp.ne.s32.totalorder %s201, %s203
      %p210 = scmp.eq.s32.totalorder %s36, 1
      %p211 = por %p209, %p210
      %p212 = scmp.ne.s32.totalorder %s203, %s204
      %p213 = scmp.eq.s32.totalorder %s36, 0
      %p214 = por %p212, %p213
      %p215 = scmp.ne.s32.totalorder %s203, %s204
      %p216 = scmp.eq.s32.totalorder %s37, 1
      %p217 = por %p215, %p216
      %p219 = scmp.ne.s32.totalorder %s204, %s218
      %p220 = scmp.eq.s32.totalorder %s37, 0
      %p221 = por %p219, %p220
      %s223 = sadd.s32 %s222, 1
      %p226 = scmp.eq.s32.totalorder %s31, 1
      %p227 = scmp.ne.s32.totalorder %s222, %s224
      %p228 = scmp.eq.s32.totalorder %s31, 0
      %p229 = por %p227, %p228
      %p230 = scmp.ne.s32.totalorder %s222, %s224
      %p231 = scmp.eq.s32.totalorder %s36, 1
      %p232 = por %p230, %p231
      %p233 = scmp.ne.s32.totalorder %s224, %s225
      %p234 = scmp.eq.s32.totalorder %s36, 0
      %p235 = por %p233, %p234
      %p236 = scmp.ne.s32.totalorder %s224, %s225
      %p237 = scmp.eq.s32.totalorder %s37, 1
      %p238 = por %p236, %p237
      %p240 = scmp.ne.s32.totalorder %s225, %s239
      %p241 = scmp.eq.s32.totalorder %s37, 0
      %p242 = por %p240, %p241
      %s244 = sadd.s32 %s243, 1
      %p247 = scmp.eq.s32.totalorder %s31, 1
      %p248 = scmp.ne.s32.totalorder %s243, %s245
      %p249 = scmp.eq.s32.totalorder %s31, 0
      %p250 = por %p248, %p249
      %p251 = scmp.ne.s32.totalorder %s243, %s245
      %p252 = scmp.eq.s32.totalorder %s36, 1
      %p253 = por %p251, %p252
      %p254 = scmp.ne.s32.totalorder %s245, %s246
      %p255 = scmp.eq.s32.totalorder %s36, 0
      %p256 = por %p254, %p255
      %p257 = scmp.ne.s32.totalorder %s245, %s246
      %p258 = scmp.eq.s32.totalorder %s37, 1
      %p259 = por %p257, %p258
      %p261 = scmp.ne.s32.totalorder %s246, %s260
      %p262 = scmp.eq.s32.totalorder %s37, 0
      %p263 = por %p261, %p262
      %s265 = sadd.s32 %s264, 1
      %p268 = scmp.eq.s32.totalorder %s31, 1
      %p269 = scmp.ne.s32.totalorder %s264, %s266
      %p270 = scmp.eq.s32.totalorder %s31, 0
      %p271 = por %p269, %p270
      %p272 = scmp.ne.s32.totalorder %s264, %s266
      %p273 = scmp.eq.s32.totalorder %s36, 1
      %p274 = por %p272, %p273
      %p275 = scmp.ne.s32.totalorder %s266, %s267
      %p276 = scmp.eq.s32.totalorder %s36, 0
      %p277 = por %p275, %p276
      %p278 = scmp.ne.s32.totalorder %s266, %s267
      %p279 = scmp.eq.s32.totalorder %s37, 1
      %p280 = por %p278, %p279
      %p282 = scmp.ne.s32.totalorder %s267, %s281
      %p283 = scmp.eq.s32.totalorder %s37, 0
      %p284 = por %p282, %p283
      %s286 = sadd.s32 %s285, 1
      %p289 = scmp.eq.s32.totalorder %s31, 1
      %p290 = scmp.ne.s32.totalorder %s285, %s287
      %p291 = scmp.eq.s32.totalorder %s31, 0
      %p292 = por %p290, %p291
      %p293 = scmp.ne.s32.totalorder %s285, %s287
      %p294 = scmp.eq.s32.totalorder %s36, 1
      %p295 = por %p293, %p294
      %p296 = scmp.ne.s32.totalorder %s287, %s288
      %p297 = scmp.eq.s32.totalorder %s36, 0
      %p298 = por %p296, %p297
      %p299 = scmp.ne.s32.totalorder %s287, %s288
      %p300 = scmp.eq.s32.totalorder %s37, 1
      %p301 = por %p299, %p300
      %p303 = scmp.ne.s32.totalorder %s288, %s302
      %p304 = scmp.eq.s32.totalorder %s37, 0
      %p305 = por %p303, %p304
      %s307 = sadd.s32 %s306, 1
      %p310 = scmp.eq.s32.totalorder %s31, 1
      %p311 = scmp.ne.s32.totalorder %s306, %s308
      %p312 = scmp.eq.s32.totalorder %s31, 0
      %p313 = por %p311, %p312
      %p314 = scmp.ne.s32.totalorder %s306, %s308
      %p315 = scmp.eq.s32.totalorder %s36, 1
      %p316 = por %p314, %p315
      %p317 = scmp.ne.s32.totalorder %s308, %s309
      %p318 = scmp.eq.s32.totalorder %s36, 0
      %p319 = por %p317, %p318
      %p320 = scmp.ne.s32.totalorder %s308, %s309
      %p321 = scmp.eq.s32.totalorder %s37, 1
      %p322 = por %p320, %p321
      %p324 = scmp.ne.s32.totalorder %s309, %s323
      %p325 = scmp.eq.s32.totalorder %s37, 0
      %p326 = por %p324, %p325
      %s328 = sadd.s32 %s327, 1
      %p331 = scmp.eq.s32.totalorder %s31, 1
      %p332 = scmp.ne.s32.totalorder %s327, %s329
      %p333 = scmp.eq.s32.totalorder %s31, 0
      %p334 = por %p332, %p333
      %p335 = scmp.ne.s32.totalorder %s327, %s329
      %p336 = scmp.eq.s32.totalorder %s36, 1
      %p337 = por %p335, %p336
      %p338 = scmp.ne.s32.totalorder %s329, %s330
      %p339 = scmp.eq.s32.totalorder %s36, 0
      %p340 = por %p338, %p339
      %p341 = scmp.ne.s32.totalorder %s329, %s330
      %p342 = scmp.eq.s32.totalorder %s37, 1
      %p343 = por %p341, %p342
      %p345 = scmp.ne.s32.totalorder %s330, %s344
      %p346 = scmp.eq.s32.totalorder %s37, 0
      %p347 = por %p345, %p346
      %s348 = ssub.s32 %s31, %s38
      %p349 = scmp.eq.s32.totalorder %s348, 0
      %s351 = sadd.s32 %s350, 1
      %s352 = scalar_select %p349, %s350, %s351
      %p355 = pneg %p349
      %p356 = scmp.eq.s32.totalorder %s31, 1
      %p357 = por %p355, %p356
      %p358 = scmp.ne.s32.totalorder %s350, %s353
      %p359 = scmp.eq.s32.totalorder %s31, 0
      %p360 = por %p358, %p359
      %p361 = scmp.ne.s32.totalorder %s350, %s353
      %p362 = scmp.eq.s32.totalorder %s36, 1
      %p363 = por %p361, %p362
      %p364 = scmp.ne.s32.totalorder %s353, %s354
      %p365 = scmp.eq.s32.totalorder %s36, 0
      %p366 = por %p364, %p365
      %p367 = scmp.ne.s32.totalorder %s353, %s354
      %p368 = scmp.eq.s32.totalorder %s37, 1
      %p369 = por %p367, %p368
      %p371 = scmp.ne.s32.totalorder %s354, %s370
      %p372 = scmp.eq.s32.totalorder %s37, 0
      %p373 = por %p371, %p372
      %p374 = scmp.le.s32.totalorder 1, %s31
      %p375 = scmp.lt.s32.totalorder %s31, 3
      %p376 = pnand %p374, %p375
      %p377 = pneg %p376
      // Predicated region
      $region9: #{tpu_custom_call.1} parent=5 // pred_check
        _
      $region10: #{tpu_custom_call.1} parent=5 // pred_check_branch
        %379 = sbr.rel (%p376) target = $region12
      $region11: #{tpu_custom_call.1} parent=5 // pred_region
        %s380 = ssub.s32 %s31, 1
        // Predicated region
        $region13: #{tpu_custom_call.1} parent=11 // pred_check
          %p381 = pneg %p130
        $region14: #{tpu_custom_call.1} parent=11 // pred_check_branch
          %383 = sbr.rel (%p381) target = $region16
        $region15: #{tpu_custom_call.1} parent=11 // pred_region
          _
        $region16: #{tpu_custom_call.1} parent=11 // pred_fallthru
          _
        // Predicated region
        $region17: #{tpu_custom_call.1} parent=11 // pred_check
          %p384 = pneg %p151
        $region18: #{tpu_custom_call.1} parent=11 // pred_check_branch
          %386 = sbr.rel (%p384) target = $region20
        $region19: #{tpu_custom_call.1} parent=11 // pred_region
          _
        $region20: #{tpu_custom_call.1} parent=11 // pred_fallthru
          _
        // Predicated region
        $region21: #{tpu_custom_call.1} parent=11 // pred_check
          %p387 = pneg %p172
        $region22: #{tpu_custom_call.1} parent=11 // pred_check_branch
          %389 = sbr.rel (%p387) target = $region24
        $region23: #{tpu_custom_call.1} parent=11 // pred_region
          %391 = vsyncadd [#allocation9], 0
          %s392 = sshll.u32 %s5, 4
          %s393 = int_to_ptr.hbm [resolvable:$true] %s392
          %s394 = sshll.u32 [#allocation8], 4
          %s395 = int_to_ptr.vmem [resolvable:$true] %s394
          %400 = dma.hbm_to_vmem [thread:$0]  %s393, 256, %s395, [#allocation9], 64, 64, 4
        $region24: #{tpu_custom_call.1} parent=11 // pred_fallthru
          _
        // Predicated region
        $region25: #{tpu_custom_call.1} parent=11 // pred_check
          %p401 = pneg %p193
        $region26: #{tpu_custom_call.1} parent=11 // pred_check_branch
          %403 = sbr.rel (%p401) target = $region28
        $region27: #{tpu_custom_call.1} parent=11 // pred_region
          %405 = vsyncadd [#allocation9], 0
          %s406 = sshll.u32 %s6, 4
          %s407 = int_to_ptr.hbm [resolvable:$true] %s406
          %s408 = sshll.u32 [#allocation10], 4
          %s409 = int_to_ptr.vmem [resolvable:$true] %s408
          %414 = dma.hbm_to_vmem [thread:$0]  %s407, 256, %s409, [#allocation9], 64, 64, 4
        $region28: #{tpu_custom_call.1} parent=11 // pred_fallthru
          _
        // Predicated region
        $region29: #{tpu_custom_call.1} parent=11 // pred_check
          %p415 = pneg %p214
        $region30: #{tpu_custom_call.1} parent=11 // pred_check_branch
          %417 = sbr.rel (%p415) target = $region32
        $region31: #{tpu_custom_call.1} parent=11 // pred_region
          _
        $region32: #{tpu_custom_call.1} parent=11 // pred_fallthru
          _
        // Predicated region
        $region33: #{tpu_custom_call.1} parent=11 // pred_check
          %p418 = pneg %p235
        $region34: #{tpu_custom_call.1} parent=11 // pred_check_branch
          %420 = sbr.rel (%p418) target = $region36
        $region35: #{tpu_custom_call.1} parent=11 // pred_region
          _
        $region36: #{tpu_custom_call.1} parent=11 // pred_fallthru
          _
        // Predicated region
        $region37: #{tpu_custom_call.1} parent=11 // pred_check
          %p421 = pneg %p256
        $region38: #{tpu_custom_call.1} parent=11 // pred_check_branch
          %423 = sbr.rel (%p421) target = $region40
        $region39: #{tpu_custom_call.1} parent=11 // pred_region
          _
        $region40: #{tpu_custom_call.1} parent=11 // pred_fallthru
          _
        // Predicated region
        $region41: #{tpu_custom_call.1} parent=11 // pred_check
          %p424 = pneg %p277
        $region42: #{tpu_custom_call.1} parent=11 // pred_check_branch
          %426 = sbr.rel (%p424) target = $region44
        $region43: #{tpu_custom_call.1} parent=11 // pred_region
          %428 = vsyncadd [#allocation12], 0
          %s429 = sshll.u32 %s10, 4
          %s430 = int_to_ptr.hbm [resolvable:$true] %s429
          %s431 = sshll.u32 [#allocation11], 4
          %s432 = int_to_ptr.vmem [resolvable:$true] %s431
          %437 = dma.hbm_to_vmem [thread:$0]  %s430, 512, %s432, [#allocation12], 64, 64, 4
        $region44: #{tpu_custom_call.1} parent=11 // pred_fallthru
          _
        // Predicated region
        $region45: #{tpu_custom_call.1} parent=11 // pred_check
          %p438 = pneg %p298
        $region46: #{tpu_custom_call.1} parent=11 // pred_check_branch
          %440 = sbr.rel (%p438) target = $region48
        $region47: #{tpu_custom_call.1} parent=11 // pred_region
          _
        $region48: #{tpu_custom_call.1} parent=11 // pred_fallthru
          _
        // Predicated region
        $region49: #{tpu_custom_call.1} parent=11 // pred_check
          %p441 = pneg %p319
        $region50: #{tpu_custom_call.1} parent=11 // pred_check_branch
          %443 = sbr.rel (%p441) target = $region52
        $region51: #{tpu_custom_call.1} parent=11 // pred_region
          _
        $region52: #{tpu_custom_call.1} parent=11 // pred_fallthru
          _
        // Predicated region
        $region53: #{tpu_custom_call.1} parent=11 // pred_check
          %p444 = pneg %p340
        $region54: #{tpu_custom_call.1} parent=11 // pred_check_branch
          %446 = sbr.rel (%p444) target = $region56
        $region55: #{tpu_custom_call.1} parent=11 // pred_region
          _
        $region56: #{tpu_custom_call.1} parent=11 // pred_fallthru
          _
      $region12: #{tpu_custom_call.1} parent=5 // pred_fallthru
        _
      %p447 = scmp.lt.s32.totalorder %s31, 2
      // Predicated region
      $region57: #{tpu_custom_call.1} parent=5 // pred_check
        %p448 = pneg %p447
      $region58: #{tpu_custom_call.1} parent=5 // pred_check_branch
        %450 = sbr.rel (%p448) target = $region60
      $region59: #{tpu_custom_call.1} parent=5 // pred_region
        // Predicated region
        $region61: #{tpu_custom_call.1} parent=59 // pred_check
          %p451 = pneg %p51
        $region62: #{tpu_custom_call.1} parent=59 // pred_check_branch
          %453 = sbr.rel (%p451) target = $region64
        $region63: #{tpu_custom_call.1} parent=59 // pred_region
          %s454 = sand.u32 %s41, 1
          %s455 = scalar_lea.sflag [#allocation3], %s454
          %s456 = sand.u32 %s41, 1
          %s457 = smul.addr %s456, 4
          %s458 = scalar_lea.vmem [#allocation2], %s457
          %460 = vsyncadd %s455, 0
          %s461 = smul.addr %s31, 4
          %s462 = scalar_lea.hbm %s0, %s461
          %s464 = sshll.u32 %s462, 4
          %s465 = int_to_ptr.hbm [resolvable:$true] %s464
          %s466 = sshll.u32 %s458, 4
          %s467 = int_to_ptr.vmem [resolvable:$true] %s466
          %469 = dma.hbm_to_vmem [thread:$0]  %s465, 64, %s467, %s455
        $region64: #{tpu_custom_call.1} parent=59 // pred_fallthru
          _
        // Predicated region
        $region65: #{tpu_custom_call.1} parent=59 // pred_check
          %p470 = pneg %p77
        $region66: #{tpu_custom_call.1} parent=59 // pred_check_branch
          %472 = sbr.rel (%p470) target = $region68
        $region67: #{tpu_custom_call.1} parent=59 // pred_region
          %s473 = sand.u32 %s31, 1
          %s474 = scalar_lea.sflag [#allocation6], %s473
          %s475 = sand.u32 %s67, 1
          %s476 = smul.addr %s475, 64
          %s477 = scalar_lea.vmem [#allocation5], %s476
          %s478 = smul.u32 8, %s31
          %480 = vsyncadd %s474, 0
          %s481 = smul.addr %s478, 2
          %s482 = smul.addr %s481, 4
          %s483 = scalar_lea.hbm %s1, %s482
          %s484 = sshll.u32 %s483, 4
          %s485 = int_to_ptr.hbm [resolvable:$true] %s484
          %s486 = sshll.u32 %s477, 4
          %s487 = int_to_ptr.vmem [resolvable:$true] %s486
          %492 = dma.hbm_to_vmem [thread:$0]  %s485, 1024, %s487, %s474, 64, 64, 4
        $region68: #{tpu_custom_call.1} parent=59 // pred_fallthru
          _
        // Predicated region
        $region69: #{tpu_custom_call.1} parent=59 // pred_check
          %p493 = pneg %p103
        $region70: #{tpu_custom_call.1} parent=59 // pred_check_branch
          %495 = sbr.rel (%p493) target = $region72
        $region71: #{tpu_custom_call.1} parent=59 // pred_region
          %s496 = sand.u32 %s31, 1
          %s497 = scalar_lea.sflag [#allocation6], %s496
          %s498 = sand.u32 %s93, 1
          %s499 = smul.addr %s498, 4
          %s500 = scalar_lea.vmem [#allocation7], %s499
          %502 = vsyncadd %s497, 0
          %s503 = smul.addr %s31, 4
          %s504 = scalar_lea.hbm %s2, %s503
          %s506 = sshll.u32 %s504, 4
          %s507 = int_to_ptr.hbm [resolvable:$true] %s506
          %s508 = sshll.u32 %s500, 4
          %s509 = int_to_ptr.vmem [resolvable:$true] %s508
          %511 = dma.hbm_to_vmem [thread:$0]  %s507, 64, %s509, %s497
        $region72: #{tpu_custom_call.1} parent=59 // pred_fallthru
          _
      $region60: #{tpu_custom_call.1} parent=5 // pred_fallthru
        _
      %p512 = scmp.le.s32.totalorder 1, %s31
      %p513 = scmp.lt.s32.totalorder %s31, 3
      %p514 = pnand %p512, %p513
      %p515 = pneg %p514
      // Predicated region
      $region73: #{tpu_custom_call.1} parent=5 // pred_check
        _
      $region74: #{tpu_custom_call.1} parent=5 // pred_check_branch
        %517 = sbr.rel (%p514) target = $region76
      $region75: #{tpu_custom_call.1} parent=5 // pred_region
        %s518 = ssub.s32 %s31, 1
        %s519 = sand.u32 %s44, 1
        %s520 = scalar_lea.sflag [#allocation3], %s519
        %s521 = sand.u32 %s44, 1
        %s522 = smul.addr %s521, 4
        %s523 = scalar_lea.vmem [#allocation2], %s522
        // Predicated region
        $region77: #{tpu_custom_call.1} parent=75 // pred_check
          %p524 = pneg %p57
        $region78: #{tpu_custom_call.1} parent=75 // pred_check_branch
          %526 = sbr.rel (%p524) target = $region80
        $region79: #{tpu_custom_call.1} parent=75 // pred_region
          %528 = dma.done %s520, 64
        $region80: #{tpu_custom_call.1} parent=75 // pred_fallthru
          _
        %s529 = sand.u32 %s36, 1
        %s530 = scalar_lea.sflag [#allocation6], %s529
        %s531 = sand.u32 %s70, 1
        %s532 = smul.addr %s531, 64
        %s533 = scalar_lea.vmem [#allocation5], %s532
        // Predicated region
        $region81: #{tpu_custom_call.1} parent=75 // pred_check
          %p534 = pneg %p83
        $region82: #{tpu_custom_call.1} parent=75 // pred_check_branch
          %536 = sbr.rel (%p534) target = $region84
        $region83: #{tpu_custom_call.1} parent=75 // pred_region
          %538 = dma.done %s530, 1024
        $region84: #{tpu_custom_call.1} parent=75 // pred_fallthru
          _
        %s539 = sand.u32 %s36, 1
        %s540 = scalar_lea.sflag [#allocation6], %s539
        %s541 = sand.u32 %s96, 1
        %s542 = smul.addr %s541, 4
        %s543 = scalar_lea.vmem [#allocation7], %s542
        // Predicated region
        $region85: #{tpu_custom_call.1} parent=75 // pred_check
          %p544 = pneg %p109
        $region86: #{tpu_custom_call.1} parent=75 // pred_check_branch
          %546 = sbr.rel (%p544) target = $region88
        $region87: #{tpu_custom_call.1} parent=75 // pred_region
          %548 = dma.done %s540, 64
        $region88: #{tpu_custom_call.1} parent=75 // pred_fallthru
          _
        // Predicated region
        $region89: #{tpu_custom_call.1} parent=75 // pred_check
          %p549 = pneg %p172
        $region90: #{tpu_custom_call.1} parent=75 // pred_check_branch
          %551 = sbr.rel (%p549) target = $region92
        $region91: #{tpu_custom_call.1} parent=75 // pred_region
          %553 = dma.done [#allocation9], 256
        $region92: #{tpu_custom_call.1} parent=75 // pred_fallthru
          _
        // Predicated region
        $region93: #{tpu_custom_call.1} parent=75 // pred_check
          %p554 = pneg %p193
        $region94: #{tpu_custom_call.1} parent=75 // pred_check_branch
          %556 = sbr.rel (%p554) target = $region96
        $region95: #{tpu_custom_call.1} parent=75 // pred_region
          %558 = dma.done [#allocation9], 256
        $region96: #{tpu_custom_call.1} parent=75 // pred_fallthru
          _
        // Predicated region
        $region97: #{tpu_custom_call.1} parent=75 // pred_check
          %p559 = pneg %p277
        $region98: #{tpu_custom_call.1} parent=75 // pred_check_branch
          %561 = sbr.rel (%p559) target = $region100
        $region99: #{tpu_custom_call.1} parent=75 // pred_region
          %563 = dma.done [#allocation12], 512
        $region100: #{tpu_custom_call.1} parent=75 // pred_fallthru
          _
        %s564 = sand.u32 %s44, 1
        %s565 = scalar_lea.sflag [#allocation3], %s564
        %s566 = sand.u32 %s44, 1
        %s567 = smul.addr %s566, 4
        %s568 = scalar_lea.vmem [#allocation2], %s567
        %p569 = pneg %p57
        %p570 = pneg %p54
        %s571 = sand.u32 %s36, 1
        %s572 = scalar_lea.sflag [#allocation6], %s571
        %s573 = sand.u32 %s70, 1
        %s574 = smul.addr %s573, 64
        %s575 = scalar_lea.vmem [#allocation5], %s574
        %p576 = pneg %p83
        %p577 = pneg %p80
        %s578 = sand.u32 %s36, 1
        %s579 = scalar_lea.sflag [#allocation6], %s578
        %s580 = sand.u32 %s96, 1
        %s581 = smul.addr %s580, 4
        %s582 = scalar_lea.vmem [#allocation7], %s581
        %p583 = pneg %p109
        %p584 = pneg %p106
        %p585 = pneg %p130
        %p586 = pneg %p127
        %p587 = pneg %p151
        %p588 = pneg %p148
        %p589 = pneg %p172
        %p590 = pneg %p169
        %p591 = pneg %p193
        %p592 = pneg %p190
        %p593 = pneg %p214
        %p594 = pneg %p211
        %p595 = pneg %p235
        %p596 = pneg %p232
        %p597 = pneg %p256
        %p598 = pneg %p253
        %p599 = pneg %p277
        %p600 = pneg %p274
        %p601 = pneg %p298
        %p602 = pneg %p295
        %p603 = pneg %p319
        %p604 = pneg %p316
        %p605 = pneg %p340
        %p606 = pneg %p337
        %p607 = pneg %p366
        %p608 = pneg %p363
        %s609 = sand.u32 %s353, 1
        %s610 = scalar_lea.sflag [#allocation4], %s609
        %s611 = sand.u32 %s353, 1
        %s612 = smul.addr %s611, 8
        %s613 = scalar_lea.vmem [#allocation13], %s612
        %s614 = smul.u32 8, %s36
        %v616 = vld [vmem:[%s523] sm:$0xf]
        %v617 = vld [vmem:[%s3] sm:$0xf]
        %v618 = vld [vmem:[%s3 + $0x4] sm:$0xf]
        %v619 = vld [vmem:[%s3 + $0x8] sm:$0xf]
        %v620 = vld [vmem:[%s3 + $0xc] sm:$0xf]
        %v621 = vld [vmem:[%s4] sm:$0x1]
        %v623 = vperm.slane %v621, 0
        %v629 = vunpack.c.l.b16 %v617
        %v630 = vunpack.c.l.b16 %v618
        %v631 = vunpack.c.l.b16 %v619
        %v632 = vunpack.c.l.b16 %v620
        %v633 = vpack.c.b16 %v630, %v629
        %v634 = vpack.c.b16 %v632, %v631
        %vm637 = vcmask 261120
        %v639 = vsel %vm637, %v616, 0
        %641 = vmatpush.bf16.msra.mxu0 0
        %642 = vmatpush.bf16.msra.mxu0 0
        %643 = vmatpush.bf16.msra.mxu0 0
        %644 = vmatpush.bf16.msra.mxu0 0
        %645 = vmatpush.bf16.msra.mxu0 0
        %646 = vmatpush.bf16.msra.mxu0 0
        %647 = vmatpush.bf16.msra.mxu0 %v634
        %648 = vmatpush.bf16.msra.mxu0 %v633
        %649 = vmatmul.bf16.gmra.mxu0 %v639
        %v650 = vpop.f32.mrf.mxu0
        %v651 = vadd.f32 %v623, %v650
        %v652 = vpop.f32.mrf.mxu0
        %653 = vdwg.mxu0
        %v654 = vsub.f32 0.0, %v651
        %v655 = vmul.f32 %v654, 1.442695
        %v656 = vpow.pop %v655
        %v657 = vadd.f32 %v656, 1.0
        %v658 = vrcp.pop %v657
        %v659 = vld [vmem:[%s533] sm:$0xf]
        %v660 = vld [vmem:[%s533 + $0x4] sm:$0xf]
        %v661 = vld [vmem:[%s533 + $0x8] sm:$0xf]
        %v662 = vld [vmem:[%s533 + $0xc] sm:$0xf]
        %v663 = vld [vmem:[%s533 + $0x10] sm:$0xf]
        %v664 = vld [vmem:[%s533 + $0x14] sm:$0xf]
        %v665 = vld [vmem:[%s533 + $0x18] sm:$0xf]
        %v666 = vld [vmem:[%s533 + $0x1c] sm:$0xf]
        %v667 = vld [vmem:[%s533 + $0x20] sm:$0xf]
        %v668 = vld [vmem:[%s533 + $0x24] sm:$0xf]
        %v669 = vld [vmem:[%s533 + $0x28] sm:$0xf]
        %v670 = vld [vmem:[%s533 + $0x2c] sm:$0xf]
        %v671 = vld [vmem:[%s533 + $0x30] sm:$0xf]
        %v672 = vld [vmem:[%s533 + $0x34] sm:$0xf]
        %v673 = vld [vmem:[%s533 + $0x38] sm:$0xf]
        %v674 = vld [vmem:[%s533 + $0x3c] sm:$0xf]
        %v675 = vunpack.c.l.bf16 %v659
        %v676 = vunpack.c.l.bf16 %v660
        %v677 = vunpack.c.l.bf16 %v661
        %v678 = vunpack.c.l.bf16 %v662
        %v679 = vunpack.c.l.bf16 %v663
        %v680 = vunpack.c.l.bf16 %v664
        %v681 = vunpack.c.l.bf16 %v665
        %v682 = vunpack.c.l.bf16 %v666
        %v683 = vunpack.c.l.bf16 %v667
        %v684 = vunpack.c.l.bf16 %v668
        %v685 = vunpack.c.l.bf16 %v669
        %v686 = vunpack.c.l.bf16 %v670
        %v687 = vunpack.c.l.bf16 %v671
        %v688 = vunpack.c.l.bf16 %v672
        %v689 = vunpack.c.l.bf16 %v673
        %v690 = vunpack.c.l.bf16 %v674
        %v692 = vrot.slane %v658, 1
        %v693 = vrot.slane %v658, 2
        %v694 = vrot.slane %v658, 3
        %v695 = vrot.slane %v658, 4
        %v696 = vrot.slane %v658, 5
        %v697 = vrot.slane %v658, 6
        %v698 = vrot.slane %v658, 7
        %v699 = vperm.slane %v658, 0
        %v700 = vperm.slane %v692, 0
        %v701 = vperm.slane %v693, 0
        %v702 = vperm.slane %v694, 0
        %v703 = vperm.slane %v695, 0
        %v704 = vperm.slane %v696, 0
        %v705 = vperm.slane %v697, 0
        %v706 = vperm.slane %v698, 0
        %v715 = vmul.f32 %v675, %v699
        %v716 = vmul.f32 %v676, %v699
        %v717 = vmul.f32 %v677, %v700
        %v718 = vmul.f32 %v678, %v700
        %v719 = vmul.f32 %v679, %v701
        %v720 = vmul.f32 %v680, %v701
        %v721 = vmul.f32 %v681, %v702
        %v722 = vmul.f32 %v682, %v702
        %v723 = vmul.f32 %v683, %v703
        %v724 = vmul.f32 %v684, %v703
        %v725 = vmul.f32 %v685, %v704
        %v726 = vmul.f32 %v686, %v704
        %v727 = vmul.f32 %v687, %v705
        %v728 = vmul.f32 %v688, %v705
        %v729 = vmul.f32 %v689, %v706
        %v730 = vmul.f32 %v690, %v706
        %v731 = vpack.c.bf16 %v715, %v715
        %v732 = vpack.c.bf16 %v716, %v716
        %v733 = vpack.c.bf16 %v717, %v717
        %v734 = vpack.c.bf16 %v718, %v718
        %v735 = vpack.c.bf16 %v719, %v719
        %v736 = vpack.c.bf16 %v720, %v720
        %v737 = vpack.c.bf16 %v721, %v721
        %v738 = vpack.c.bf16 %v722, %v722
        %v739 = vpack.c.bf16 %v723, %v723
        %v740 = vpack.c.bf16 %v724, %v724
        %v741 = vpack.c.bf16 %v725, %v725
        %v742 = vpack.c.bf16 %v726, %v726
        %v743 = vpack.c.bf16 %v727, %v727
        %v744 = vpack.c.bf16 %v728, %v728
        %v745 = vpack.c.bf16 %v729, %v729
        %v746 = vpack.c.bf16 %v730, %v730
        %v747 = vld [vmem:[#allocation8] sm:$0xf]
        %v748 = vld [vmem:[#allocation8 + $0x4] sm:$0xf]
        %v749 = vld [vmem:[#allocation8 + $0x8] sm:$0xf]
        %v750 = vld [vmem:[#allocation8 + $0xc] sm:$0xf]
        %v767 = vunpack.c.l.b16 %v731
        %v768 = vunpack.c.l.b16 %v732
        %v769 = vunpack.c.l.b16 %v733
        %v770 = vunpack.c.l.b16 %v734
        %v771 = vunpack.c.l.b16 %v735
        %v772 = vunpack.c.l.b16 %v736
        %v773 = vunpack.c.l.b16 %v737
        %v774 = vunpack.c.l.b16 %v738
        %v775 = vunpack.c.l.b16 %v739
        %v776 = vunpack.c.l.b16 %v740
        %v777 = vunpack.c.l.b16 %v741
        %v778 = vunpack.c.l.b16 %v742
        %v779 = vunpack.c.l.b16 %v743
        %v780 = vunpack.c.l.b16 %v744
        %v781 = vunpack.c.l.b16 %v745
        %v782 = vunpack.c.l.b16 %v746
        %v783 = vpack.c.b16 %v768, %v767
        %v784 = vpack.c.b16 %v770, %v769
        %v785 = vpack.c.b16 %v772, %v771
        %v786 = vpack.c.b16 %v774, %v773
        %v787 = vpack.c.b16 %v776, %v775
        %v788 = vpack.c.b16 %v778, %v777
        %v789 = vpack.c.b16 %v780, %v779
        %v790 = vpack.c.b16 %v782, %v781
        %v795 = vunpack.c.l.b16 %v747
        %v796 = vunpack.c.l.b16 %v748
        %v797 = vunpack.c.l.b16 %v749
        %v798 = vunpack.c.l.b16 %v750
        %v799 = vpack.c.b16 %v796, %v795
        %v800 = vpack.c.b16 %v798, %v797
        %v804 = vsel %vm637, %v783, 0
        %v807 = vsel %vm637, %v784, 0
        %v810 = vsel %vm637, %v785, 0
        %v813 = vsel %vm637, %v786, 0
        %v816 = vsel %vm637, %v787, 0
        %v819 = vsel %vm637, %v788, 0
        %v822 = vsel %vm637, %v789, 0
        %v825 = vsel %vm637, %v790, 0
        %827 = vmatpush.bf16.msra.mxu0 0
        %828 = vmatpush.bf16.msra.mxu0 0
        %829 = vmatpush.bf16.msra.mxu0 0
        %830 = vmatpush.bf16.msra.mxu0 0
        %831 = vmatpush.bf16.msra.mxu0 0
        %832 = vmatpush.bf16.msra.mxu0 0
        %833 = vmatpush.bf16.msra.mxu0 %v800
        %834 = vmatpush.bf16.msra.mxu0 %v799
        %835 = vmatmul.bf16.gmra.mxu0 %v804
        %v836 = vpop.f32.mrf.mxu0
        %v837 = vadd.f32 0.0, %v836
        %v838 = vpop.f32.mrf.mxu0
        %v839 = vadd.f32 0.0, %v838
        %840 = vmatmul.bf16.gmra.mxu0 %v807
        %v841 = vpop.f32.mrf.mxu0
        %v842 = vadd.f32 0.0, %v841
        %v843 = vpop.f32.mrf.mxu0
        %v844 = vadd.f32 0.0, %v843
        %845 = vmatmul.bf16.gmra.mxu0 %v810
        %v846 = vpop.f32.mrf.mxu0
        %v847 = vadd.f32 0.0, %v846
        %v848 = vpop.f32.mrf.mxu0
        %v849 = vadd.f32 0.0, %v848
        %850 = vmatmul.bf16.gmra.mxu0 %v813
        %v851 = vpop.f32.mrf.mxu0
        %v852 = vadd.f32 0.0, %v851
        %v853 = vpop.f32.mrf.mxu0
        %v854 = vadd.f32 0.0, %v853
        %855 = vmatmul.bf16.gmra.mxu0 %v816
        %v856 = vpop.f32.mrf.mxu0
        %v857 = vadd.f32 0.0, %v856
        %v858 = vpop.f32.mrf.mxu0
        %v859 = vadd.f32 0.0, %v858
        %860 = vmatmul.bf16.gmra.mxu0 %v819
        %v861 = vpop.f32.mrf.mxu0
        %v862 = vadd.f32 0.0, %v861
        %v863 = vpop.f32.mrf.mxu0
        %v864 = vadd.f32 0.0, %v863
        %865 = vmatmul.bf16.gmra.mxu0 %v822
        %v866 = vpop.f32.mrf.mxu0
        %v867 = vadd.f32 0.0, %v866
        %v868 = vpop.f32.mrf.mxu0
        %v869 = vadd.f32 0.0, %v868
        %870 = vmatmul.bf16.gmra.mxu0 %v825
        %v871 = vpop.f32.mrf.mxu0
        %v872 = vadd.f32 0.0, %v871
        %v873 = vpop.f32.mrf.mxu0
        %v874 = vadd.f32 0.0, %v873
        %875 = vdwg.mxu0
        %v876 = vld [vmem:[%s543] sm:$0xf]
        %v877 = vunpack.c.l.bf16 %v876
        %878 = vrot.lane.b32.xlu0 %v658, 96
        %v879 = vpop.permute.xlu0 %878
        %v881 = vmul.f32 %v877, %v879
        %v882 = vpack.c.bf16 %v881, %v881
        %v883 = vld [vmem:[#allocation10] sm:$0xf]
        %v884 = vld [vmem:[#allocation10 + $0x4] sm:$0xf]
        %v885 = vld [vmem:[#allocation10 + $0x8] sm:$0xf]
        %v886 = vld [vmem:[#allocation10 + $0xc] sm:$0xf]
        %v891 = vunpack.c.l.b16 %v883
        %v892 = vunpack.c.l.b16 %v884
        %v893 = vunpack.c.l.b16 %v885
        %v894 = vunpack.c.l.b16 %v886
        %v895 = vpack.c.b16 %v892, %v891
        %v896 = vpack.c.b16 %v894, %v893
        %v900 = vsel %vm637, %v882, 0
        %902 = vmatpush.bf16.msra.mxu0 0
        %903 = vmatpush.bf16.msra.mxu0 0
        %904 = vmatpush.bf16.msra.mxu0 0
        %905 = vmatpush.bf16.msra.mxu0 0
        %906 = vmatpush.bf16.msra.mxu0 0
        %907 = vmatpush.bf16.msra.mxu0 0
        %908 = vmatpush.bf16.msra.mxu0 %v896
        %909 = vmatpush.bf16.msra.mxu0 %v895
        %910 = vmatmul.bf16.gmra.mxu0 %v900
        %v911 = vpop.f32.mrf.mxu0
        %v912 = vadd.f32 0.0, %v911
        %v913 = vpop.f32.mrf.mxu0
        %914 = vdwg.mxu0
        %v916 = vrot.slane %v912, 1
        %v917 = vrot.slane %v912, 2
        %v918 = vrot.slane %v912, 3
        %v919 = vrot.slane %v912, 4
        %v920 = vrot.slane %v912, 5
        %v921 = vrot.slane %v912, 6
        %v922 = vrot.slane %v912, 7
        %v923 = vperm.slane %v912, 0
        %v924 = vperm.slane %v916, 0
        %v925 = vperm.slane %v917, 0
        %v926 = vperm.slane %v918, 0
        %v927 = vperm.slane %v919, 0
        %v928 = vperm.slane %v920, 0
        %v929 = vperm.slane %v921, 0
        %v930 = vperm.slane %v922, 0
        %v939 = vadd.f32 %v837, %v923
        %v940 = vadd.f32 %v839, %v923
        %v941 = vadd.f32 %v842, %v924
        %v942 = vadd.f32 %v844, %v924
        %v943 = vadd.f32 %v847, %v925
        %v944 = vadd.f32 %v849, %v925
        %v945 = vadd.f32 %v852, %v926
        %v946 = vadd.f32 %v854, %v926
        %v947 = vadd.f32 %v857, %v927
        %v948 = vadd.f32 %v859, %v927
        %v949 = vadd.f32 %v862, %v928
        %v950 = vadd.f32 %v864, %v928
        %v951 = vadd.f32 %v867, %v929
        %v952 = vadd.f32 %v869, %v929
        %v953 = vadd.f32 %v872, %v930
        %v954 = vadd.f32 %v874, %v930
        %v955 = vld [vmem:[%s7] sm:$0x1]
        %v957 = vperm.slane %v955, 0
        %v959 = vadd.f32 %v939, %v957
        %v960 = vadd.f32 %v940, %v957
        %v961 = vadd.f32 %v941, %v957
        %v962 = vadd.f32 %v942, %v957
        %v963 = vadd.f32 %v943, %v957
        %v964 = vadd.f32 %v944, %v957
        %v965 = vadd.f32 %v945, %v957
        %v966 = vadd.f32 %v946, %v957
        %v967 = vadd.f32 %v947, %v957
        %v968 = vadd.f32 %v948, %v957
        %v969 = vadd.f32 %v949, %v957
        %v970 = vadd.f32 %v950, %v957
        %v971 = vadd.f32 %v951, %v957
        %v972 = vadd.f32 %v952, %v957
        %v973 = vadd.f32 %v953, %v957
        %v974 = vadd.f32 %v954, %v957
        %v975 = vmax.f32 %v959, 0.0
        %v976 = vmax.f32 %v960, 0.0
        %v977 = vmax.f32 %v961, 0.0
        %v978 = vmax.f32 %v962, 0.0
        %v979 = vmax.f32 %v963, 0.0
        %v980 = vmax.f32 %v964, 0.0
        %v981 = vmax.f32 %v965, 0.0
        %v982 = vmax.f32 %v966, 0.0
        %v983 = vmax.f32 %v967, 0.0
        %v984 = vmax.f32 %v968, 0.0
        %v985 = vmax.f32 %v969, 0.0
        %v986 = vmax.f32 %v970, 0.0
        %v987 = vmax.f32 %v971, 0.0
        %v988 = vmax.f32 %v972, 0.0
        %v989 = vmax.f32 %v973, 0.0
        %v990 = vmax.f32 %v974, 0.0
        %v991 = vpack.c.bf16 %v976, %v975
        %v992 = vpack.c.bf16 %v978, %v977
        %v993 = vpack.c.bf16 %v980, %v979
        %v994 = vpack.c.bf16 %v982, %v981
        %v995 = vpack.c.bf16 %v984, %v983
        %v996 = vpack.c.bf16 %v986, %v985
        %v997 = vpack.c.bf16 %v988, %v987
        %v998 = vpack.c.bf16 %v990, %v989
        %v999 = vld [vmem:[%s8] sm:$0xf]
        %v1000 = vld [vmem:[%s8 + $0x4] sm:$0xf]
        %v1001 = vld [vmem:[%s8 + $0x8] sm:$0xf]
        %v1002 = vld [vmem:[%s8 + $0xc] sm:$0xf]
        %v1003 = vld [vmem:[%s8 + $0x10] sm:$0xf]
        %v1004 = vld [vmem:[%s8 + $0x14] sm:$0xf]
        %v1005 = vld [vmem:[%s8 + $0x18] sm:$0xf]
        %v1006 = vld [vmem:[%s8 + $0x1c] sm:$0xf]
        %v1007 = vld [vmem:[%s9] sm:$0x1]
        %v1009 = vperm.slane %v1007, 0
        %v1019 = vunpack.c.l.b16 %v999
        %v1020 = vunpack.c.l.b16 %v1000
        %v1021 = vunpack.c.l.b16 %v1001
        %v1022 = vunpack.c.l.b16 %v1002
        %v1023 = vunpack.c.l.b16 %v1003
        %v1024 = vunpack.c.l.b16 %v1004
        %v1025 = vunpack.c.l.b16 %v1005
        %v1026 = vunpack.c.l.b16 %v1006
        %v1027 = vpack.c.b16 %v1020, %v1019
        %v1028 = vpack.c.b16 %v1022, %v1021
        %v1029 = vpack.c.b16 %v1024, %v1023
        %v1030 = vpack.c.b16 %v1026, %v1025
        %vm1035 = vcmask 523264
        %v1037 = vsel %vm1035, %v991, 0
        %v1040 = vsel %vm1035, %v992, 0
        %v1043 = vsel %vm1035, %v993, 0
        %v1046 = vsel %vm1035, %v994, 0
        %v1049 = vsel %vm1035, %v995, 0
        %v1052 = vsel %vm1035, %v996, 0
        %v1055 = vsel %vm1035, %v997, 0
        %v1058 = vsel %vm1035, %v998, 0
        %1060 = vmatpush.bf16.msra.mxu0 0
        %1061 = vmatpush.bf16.msra.mxu0 0
        %1062 = vmatpush.bf16.msra.mxu0 0
        %1063 = vmatpush.bf16.msra.mxu0 0
        %1064 = vmatpush.bf16.msra.mxu0 %v1030
        %1065 = vmatpush.bf16.msra.mxu0 %v1029
        %1066 = vmatpush.bf16.msra.mxu0 %v1028
        %1067 = vmatpush.bf16.msra.mxu0 %v1027
        %1068 = vmatmul.bf16.gmra.mxu0 %v1037
        %v1069 = vpop.f32.mrf.mxu0
        %v1070 = vadd.f32 %v1009, %v1069
        %v1071 = vpop.f32.mrf.mxu0
        %1072 = vmatmul.bf16.gmra.mxu0 %v1040
        %v1073 = vpop.f32.mrf.mxu0
        %v1074 = vadd.f32 %v1009, %v1073
        %v1075 = vpop.f32.mrf.mxu0
        %1076 = vmatmul.bf16.gmra.mxu0 %v1043
        %v1077 = vpop.f32.mrf.mxu0
        %v1078 = vadd.f32 %v1009, %v1077
        %v1079 = vpop.f32.mrf.mxu0
        %1080 = vmatmul.bf16.gmra.mxu0 %v1046
        %v1081 = vpop.f32.mrf.mxu0
        %v1082 = vadd.f32 %v1009, %v1081
        %v1083 = vpop.f32.mrf.mxu0
        %1084 = vmatmul.bf16.gmra.mxu0 %v1049
        %v1085 = vpop.f32.mrf.mxu0
        %v1086 = vadd.f32 %v1009, %v1085
        %v1087 = vpop.f32.mrf.mxu0
        %1088 = vmatmul.bf16.gmra.mxu0 %v1052
        %v1089 = vpop.f32.mrf.mxu0
        %v1090 = vadd.f32 %v1009, %v1089
        %v1091 = vpop.f32.mrf.mxu0
        %1092 = vmatmul.bf16.gmra.mxu0 %v1055
        %v1093 = vpop.f32.mrf.mxu0
        %v1094 = vadd.f32 %v1009, %v1093
        %v1095 = vpop.f32.mrf.mxu0
        %1096 = vmatmul.bf16.gmra.mxu0 %v1058
        %v1097 = vpop.f32.mrf.mxu0
        %v1098 = vadd.f32 %v1009, %v1097
        %v1099 = vpop.f32.mrf.mxu0
        %1100 = vdwg.mxu0
        %v1101 = vmax.f32 %v1070, 0.0
        %v1102 = vmax.f32 %v1074, 0.0
        %v1103 = vmax.f32 %v1078, 0.0
        %v1104 = vmax.f32 %v1082, 0.0
        %v1105 = vmax.f32 %v1086, 0.0
        %v1106 = vmax.f32 %v1090, 0.0
        %v1107 = vmax.f32 %v1094, 0.0
        %v1108 = vmax.f32 %v1098, 0.0
        %v1109 = vld [vmem:[#allocation11] sm:$0xf]
        %v1110 = vld [vmem:[#allocation11 + $0x4] sm:$0xf]
        %v1111 = vld [vmem:[#allocation11 + $0x8] sm:$0xf]
        %v1112 = vld [vmem:[#allocation11 + $0xc] sm:$0xf]
        %v1113 = vld [vmem:[#allocation11 + $0x10] sm:$0xf]
        %v1114 = vld [vmem:[#allocation11 + $0x14] sm:$0xf]
        %v1115 = vld [vmem:[#allocation11 + $0x18] sm:$0xf]
        %v1116 = vld [vmem:[#allocation11 + $0x1c] sm:$0xf]
        %v1117 = vld [vmem:[%s11] sm:$0x1]
        %v1118 = vld [vmem:[%s12] sm:$0xf]
        %v1119 = vld [vmem:[%s12 + $0x4] sm:$0xf]
        %v1120 = vld [vmem:[%s12 + $0x8] sm:$0xf]
        %v1121 = vld [vmem:[%s12 + $0xc] sm:$0xf]
        %v1122 = vld [vmem:[%s12 + $0x10] sm:$0xf]
        %v1123 = vld [vmem:[%s12 + $0x14] sm:$0xf]
        %v1124 = vld [vmem:[%s12 + $0x18] sm:$0xf]
        %v1125 = vld [vmem:[%s12 + $0x1c] sm:$0xf]
        %v1126 = vld [vmem:[%s13] sm:$0x1]
        %vm1127 = vcmask 519168
        %v1128 = vsel %vm1127, %v1101, 0.0
        %v1129 = vrot.slane %v1128, 4
        %v1130 = vadd.f32 %v1128, %v1129
        %v1131 = vrot.slane %v1130, 2
        %v1132 = vadd.f32 %v1130, %v1131
        %v1133 = vrot.slane %v1132, 1
        %v1134 = vadd.f32 %v1132, %v1133
        %v1135 = vsel %vm1127, %v1102, 0.0
        %v1136 = vrot.slane %v1135, 4
        %v1137 = vadd.f32 %v1135, %v1136
        %v1138 = vrot.slane %v1137, 2
        %v1139 = vadd.f32 %v1137, %v1138
        %v1140 = vrot.slane %v1139, 1
        %v1141 = vadd.f32 %v1139, %v1140
        %v1142 = vsel %vm1127, %v1103, 0.0
        %v1143 = vrot.slane %v1142, 4
        %v1144 = vadd.f32 %v1142, %v1143
        %v1145 = vrot.slane %v1144, 2
        %v1146 = vadd.f32 %v1144, %v1145
        %v1147 = vrot.slane %v1146, 1
        %v1148 = vadd.f32 %v1146, %v1147
        %v1149 = vsel %vm1127, %v1104, 0.0
        %v1150 = vrot.slane %v1149, 4
        %v1151 = vadd.f32 %v1149, %v1150
        %v1152 = vrot.slane %v1151, 2
        %v1153 = vadd.f32 %v1151, %v1152
        %v1154 = vrot.slane %v1153, 1
        %v1155 = vadd.f32 %v1153, %v1154
        %v1156 = vsel %vm1127, %v1105, 0.0
        %v1157 = vrot.slane %v1156, 4
        %v1158 = vadd.f32 %v1156, %v1157
        %v1159 = vrot.slane %v1158, 2
        %v1160 = vadd.f32 %v1158, %v1159
        %v1161 = vrot.slane %v1160, 1
        %v1162 = vadd.f32 %v1160, %v1161
        %v1163 = vsel %vm1127, %v1106, 0.0
        %v1164 = vrot.slane %v1163, 4
        %v1165 = vadd.f32 %v1163, %v1164
        %v1166 = vrot.slane %v1165, 2
        %v1167 = vadd.f32 %v1165, %v1166
        %v1168 = vrot.slane %v1167, 1
        %v1169 = vadd.f32 %v1167, %v1168
        %v1170 = vsel %vm1127, %v1107, 0.0
        %v1171 = vrot.slane %v1170, 4
        %v1172 = vadd.f32 %v1170, %v1171
        %v1173 = vrot.slane %v1172, 2
        %v1174 = vadd.f32 %v1172, %v1173
        %v1175 = vrot.slane %v1174, 1
        %v1176 = vadd.f32 %v1174, %v1175
        %v1177 = vsel %vm1127, %v1108, 0.0
        %v1178 = vrot.slane %v1177, 4
        %v1179 = vadd.f32 %v1177, %v1178
        %v1180 = vrot.slane %v1179, 2
        %v1181 = vadd.f32 %v1179, %v1180
        %v1182 = vrot.slane %v1181, 1
        %v1183 = vadd.f32 %v1181, %v1182
        %v1184 = vmul.f32 %v1134, 0.25
        %v1185 = vmul.f32 %v1141, 0.25
        %v1186 = vmul.f32 %v1148, 0.25
        %v1187 = vmul.f32 %v1155, 0.25
        %v1188 = vmul.f32 %v1162, 0.25
        %v1189 = vmul.f32 %v1169, 0.25
        %v1190 = vmul.f32 %v1176, 0.25
        %v1191 = vmul.f32 %v1183, 0.25
        %1192 = vrot.lane.b32.xlu0 %v658, 64
        %v1193 = vpop.permute.xlu0 %1192
        %1194 = vrot.lane.b32.xlu0 %v692, 64
        %v1195 = vpop.permute.xlu0 %1194
        %1196 = vrot.lane.b32.xlu0 %v693, 64
        %v1197 = vpop.permute.xlu0 %1196
        %1198 = vrot.lane.b32.xlu0 %v694, 64
        %v1199 = vpop.permute.xlu0 %1198
        %1200 = vrot.lane.b32.xlu0 %v695, 64
        %v1201 = vpop.permute.xlu0 %1200
        %1202 = vrot.lane.b32.xlu0 %v696, 64
        %v1203 = vpop.permute.xlu0 %1202
        %1204 = vrot.lane.b32.xlu0 %v697, 64
        %v1205 = vpop.permute.xlu0 %1204
        %1206 = vrot.lane.b32.xlu0 %v698, 64
        %v1207 = vpop.permute.xlu0 %1206
        %v1216 = vmul.f32 %v1184, %v1193
        %v1217 = vmul.f32 %v1185, %v1195
        %v1218 = vmul.f32 %v1186, %v1197
        %v1219 = vmul.f32 %v1187, %v1199
        %v1220 = vmul.f32 %v1188, %v1201
        %v1221 = vmul.f32 %v1189, %v1203
        %v1222 = vmul.f32 %v1190, %v1205
        %v1223 = vmul.f32 %v1191, %v1207
        %v1224 = vpack.c.bf16 %v1216, %v1216
        %v1225 = vpack.c.bf16 %v1217, %v1217
        %v1226 = vpack.c.bf16 %v1218, %v1218
        %v1227 = vpack.c.bf16 %v1219, %v1219
        %v1228 = vpack.c.bf16 %v1220, %v1220
        %v1229 = vpack.c.bf16 %v1221, %v1221
        %v1230 = vpack.c.bf16 %v1222, %v1222
        %v1231 = vpack.c.bf16 %v1223, %v1223
        %v1233 = vperm.slane %v1117, 0
        %v1243 = vunpack.c.l.b16 %v1224
        %v1244 = vunpack.c.l.b16 %v1225
        %v1245 = vunpack.c.l.b16 %v1226
        %v1246 = vunpack.c.l.b16 %v1227
        %v1247 = vunpack.c.l.b16 %v1228
        %v1248 = vunpack.c.l.b16 %v1229
        %v1249 = vunpack.c.l.b16 %v1230
        %v1250 = vunpack.c.l.b16 %v1231
        %v1251 = vrot.slane %v1244, 7
        %vm1252 = vcmask 1041409
        %v1253 = vsel %vm1252, %v1251, %v1243
        %v1254 = vrot.slane %v1245, 6
        %vm1255 = vcmask 1042434
        %v1256 = vsel %vm1255, %v1254, %v1253
        %v1257 = vrot.slane %v1246, 5
        %vm1258 = vcmask 1043459
        %v1259 = vsel %vm1258, %v1257, %v1256
        %v1260 = vrot.slane %v1247, 4
        %vm1261 = vcmask 1044484
        %v1262 = vsel %vm1261, %v1260, %v1259
        %v1263 = vrot.slane %v1248, 3
        %vm1264 = vcmask 1045509
        %v1265 = vsel %vm1264, %v1263, %v1262
        %v1266 = vrot.slane %v1249, 2
        %vm1267 = vcmask 1046534
        %v1268 = vsel %vm1267, %v1266, %v1265
        %v1269 = vrot.slane %v1250, 1
        %vm1270 = vcmask 1047559
        %v1271 = vsel %vm1270, %v1269, %v1268
        %v1272 = vpack.c.b16 %v1271, %v1271
        %v1281 = vunpack.c.l.b16 %v1109
        %v1282 = vunpack.c.l.b16 %v1110
        %v1283 = vunpack.c.l.b16 %v1111
        %v1284 = vunpack.c.l.b16 %v1112
        %v1285 = vunpack.c.l.b16 %v1113
        %v1286 = vunpack.c.l.b16 %v1114
        %v1287 = vunpack.c.l.b16 %v1115
        %v1288 = vunpack.c.l.b16 %v1116
        %v1289 = vpack.c.b16 %v1282, %v1281
        %v1290 = vpack.c.b16 %v1284, %v1283
        %v1291 = vpack.c.b16 %v1286, %v1285
        %v1292 = vpack.c.b16 %v1288, %v1287
        %v1298 = vsel %vm1035, %v1272, 0
        %1300 = vmatpush.bf16.msra.mxu0 0
        %1301 = vmatpush.bf16.msra.mxu0 0
        %1302 = vmatpush.bf16.msra.mxu0 0
        %1303 = vmatpush.bf16.msra.mxu0 0
        %1304 = vmatpush.bf16.msra.mxu0 %v1292
        %1305 = vmatpush.bf16.msra.mxu0 %v1291
        %1306 = vmatpush.bf16.msra.mxu0 %v1290
        %1307 = vmatpush.bf16.msra.mxu0 %v1289
        %1308 = vmatmul.bf16.gmra.mxu0 %v1298
        %v1309 = vpop.f32.mrf.mxu0
        %v1310 = vadd.f32 %v1233, %v1309
        %v1311 = vpop.f32.mrf.mxu0
        %1312 = vdwg.mxu0
        %v1313 = vmax.f32 %v1310, 0.0
        %v1314 = vpack.c.bf16 %v1313, %v1313
        %v1316 = vperm.slane %v1126, 0
        %v1326 = vunpack.c.l.b16 %v1118
        %v1327 = vunpack.c.l.b16 %v1119
        %v1328 = vunpack.c.l.b16 %v1120
        %v1329 = vunpack.c.l.b16 %v1121
        %v1330 = vunpack.c.l.b16 %v1122
        %v1331 = vunpack.c.l.b16 %v1123
        %v1332 = vunpack.c.l.b16 %v1124
        %v1333 = vunpack.c.l.b16 %v1125
        %v1334 = vpack.c.b16 %v1327, %v1326
        %v1335 = vpack.c.b16 %v1329, %v1328
        %v1336 = vpack.c.b16 %v1331, %v1330
        %v1337 = vpack.c.b16 %v1333, %v1332
        %v1343 = vsel %vm1035, %v1314, 0
        %1345 = vmatpush.bf16.msra.mxu0 0
        %1346 = vmatpush.bf16.msra.mxu0 0
        %1347 = vmatpush.bf16.msra.mxu0 0
        %1348 = vmatpush.bf16.msra.mxu0 0
        %1349 = vmatpush.bf16.msra.mxu0 %v1337
        %1350 = vmatpush.bf16.msra.mxu0 %v1336
        %1351 = vmatpush.bf16.msra.mxu0 %v1335
        %1352 = vmatpush.bf16.msra.mxu0 %v1334
        %1353 = vmatmul.bf16.gmra.mxu0 %v1343
        %v1354 = vpop.f32.mrf.mxu0
        %v1355 = vadd.f32 %v1316, %v1354
        %v1356 = vpop.f32.mrf.mxu0
        %1357 = vdwg.mxu0
        %v1358 = vmax.f32 %v1355, 0.0
        %v1359 = vadd.f32 %v1358, 0.0
        %v1368 = vrot.slane %v1101, 4
        %v1369 = vrot.slane %v1102, 4
        %v1370 = vrot.slane %v1103, 4
        %v1371 = vrot.slane %v1104, 4
        %v1372 = vrot.slane %v1105, 4
        %v1373 = vrot.slane %v1106, 4
        %v1374 = vrot.slane %v1107, 4
        %v1375 = vrot.slane %v1108, 4
        %v1384 = vsel %vm1127, %v1368, 0.0
        %v1385 = vrot.slane %v1384, 4
        %v1386 = vadd.f32 %v1384, %v1385
        %v1387 = vrot.slane %v1386, 2
        %v1388 = vadd.f32 %v1386, %v1387
        %v1389 = vrot.slane %v1388, 1
        %v1390 = vadd.f32 %v1388, %v1389
        %v1391 = vsel %vm1127, %v1369, 0.0
        %v1392 = vrot.slane %v1391, 4
        %v1393 = vadd.f32 %v1391, %v1392
        %v1394 = vrot.slane %v1393, 2
        %v1395 = vadd.f32 %v1393, %v1394
        %v1396 = vrot.slane %v1395, 1
        %v1397 = vadd.f32 %v1395, %v1396
        %v1398 = vsel %vm1127, %v1370, 0.0
        %v1399 = vrot.slane %v1398, 4
        %v1400 = vadd.f32 %v1398, %v1399
        %v1401 = vrot.slane %v1400, 2
        %v1402 = vadd.f32 %v1400, %v1401
        %v1403 = vrot.slane %v1402, 1
        %v1404 = vadd.f32 %v1402, %v1403
        %v1405 = vsel %vm1127, %v1371, 0.0
        %v1406 = vrot.slane %v1405, 4
        %v1407 = vadd.f32 %v1405, %v1406
        %v1408 = vrot.slane %v1407, 2
        %v1409 = vadd.f32 %v1407, %v1408
        %v1410 = vrot.slane %v1409, 1
        %v1411 = vadd.f32 %v1409, %v1410
        %v1412 = vsel %vm1127, %v1372, 0.0
        %v1413 = vrot.slane %v1412, 4
        %v1414 = vadd.f32 %v1412, %v1413
        %v1415 = vrot.slane %v1414, 2
        %v1416 = vadd.f32 %v1414, %v1415
        %v1417 = vrot.slane %v1416, 1
        %v1418 = vadd.f32 %v1416, %v1417
        %v1419 = vsel %vm1127, %v1373, 0.0
        %v1420 = vrot.slane %v1419, 4
        %v1421 = vadd.f32 %v1419, %v1420
        %v1422 = vrot.slane %v1421, 2
        %v1423 = vadd.f32 %v1421, %v1422
        %v1424 = vrot.slane %v1423, 1
        %v1425 = vadd.f32 %v1423, %v1424
        %v1426 = vsel %vm1127, %v1374, 0.0
        %v1427 = vrot.slane %v1426, 4
        %v1428 = vadd.f32 %v1426, %v1427
        %v1429 = vrot.slane %v1428, 2
        %v1430 = vadd.f32 %v1428, %v1429
        %v1431 = vrot.slane %v1430, 1
        %v1432 = vadd.f32 %v1430, %v1431
        %v1433 = vsel %vm1127, %v1375, 0.0
        %v1434 = vrot.slane %v1433, 4
        %v1435 = vadd.f32 %v1433, %v1434
        %v1436 = vrot.slane %v1435, 2
        %v1437 = vadd.f32 %v1435, %v1436
        %v1438 = vrot.slane %v1437, 1
        %v1439 = vadd.f32 %v1437, %v1438
        %v1440 = vmul.f32 %v1390, 0.25
        %v1441 = vmul.f32 %v1397, 0.25
        %v1442 = vmul.f32 %v1404, 0.25
        %v1443 = vmul.f32 %v1411, 0.25
        %v1444 = vmul.f32 %v1418, 0.25
        %v1445 = vmul.f32 %v1425, 0.25
        %v1446 = vmul.f32 %v1432, 0.25
        %v1447 = vmul.f32 %v1439, 0.25
        %v1448 = vmul.f32 %v1440, %v1193
        %v1449 = vmul.f32 %v1441, %v1195
        %v1450 = vmul.f32 %v1442, %v1197
        %v1451 = vmul.f32 %v1443, %v1199
        %v1452 = vmul.f32 %v1444, %v1201
        %v1453 = vmul.f32 %v1445, %v1203
        %v1454 = vmul.f32 %v1446, %v1205
        %v1455 = vmul.f32 %v1447, %v1207
        %v1456 = vpack.c.bf16 %v1448, %v1448
        %v1457 = vpack.c.bf16 %v1449, %v1449
        %v1458 = vpack.c.bf16 %v1450, %v1450
        %v1459 = vpack.c.bf16 %v1451, %v1451
        %v1460 = vpack.c.bf16 %v1452, %v1452
        %v1461 = vpack.c.bf16 %v1453, %v1453
        %v1462 = vpack.c.bf16 %v1454, %v1454
        %v1463 = vpack.c.bf16 %v1455, %v1455
        %v1472 = vunpack.c.l.b16 %v1456
        %v1473 = vunpack.c.l.b16 %v1457
        %v1474 = vunpack.c.l.b16 %v1458
        %v1475 = vunpack.c.l.b16 %v1459
        %v1476 = vunpack.c.l.b16 %v1460
        %v1477 = vunpack.c.l.b16 %v1461
        %v1478 = vunpack.c.l.b16 %v1462
        %v1479 = vunpack.c.l.b16 %v1463
        %v1480 = vrot.slane %v1473, 7
        %v1481 = vsel %vm1252, %v1480, %v1472
        %v1482 = vrot.slane %v1474, 6
        %v1483 = vsel %vm1255, %v1482, %v1481
        %v1484 = vrot.slane %v1475, 5
        %v1485 = vsel %vm1258, %v1484, %v1483
        %v1486 = vrot.slane %v1476, 4
        %v1487 = vsel %vm1261, %v1486, %v1485
        %v1488 = vrot.slane %v1477, 3
        %v1489 = vsel %vm1264, %v1488, %v1487
        %v1490 = vrot.slane %v1478, 2
        %v1491 = vsel %vm1267, %v1490, %v1489
        %v1492 = vrot.slane %v1479, 1
        %v1493 = vsel %vm1270, %v1492, %v1491
        %v1494 = vpack.c.b16 %v1493, %v1493
        %v1496 = vsel %vm1035, %v1494, 0
        %1498 = vmatpush.bf16.msra.mxu0 0
        %1499 = vmatpush.bf16.msra.mxu0 0
        %1500 = vmatpush.bf16.msra.mxu0 0
        %1501 = vmatpush.bf16.msra.mxu0 0
        %1502 = vmatpush.bf16.msra.mxu0 %v1292
        %1503 = vmatpush.bf16.msra.mxu0 %v1291
        %1504 = vmatpush.bf16.msra.mxu0 %v1290
        %1505 = vmatpush.bf16.msra.mxu0 %v1289
        %1506 = vmatmul.bf16.gmra.mxu0 %v1496
        %v1507 = vpop.f32.mrf.mxu0
        %v1508 = vadd.f32 %v1233, %v1507
        %v1509 = vpop.f32.mrf.mxu0
        %1510 = vdwg.mxu0
        %v1511 = vmax.f32 %v1508, 0.0
        %v1512 = vpack.c.bf16 %v1511, %v1511
        %v1514 = vsel %vm1035, %v1512, 0
        %1516 = vmatpush.bf16.msra.mxu0 0
        %1517 = vmatpush.bf16.msra.mxu0 0
        %1518 = vmatpush.bf16.msra.mxu0 0
        %1519 = vmatpush.bf16.msra.mxu0 0
        %1520 = vmatpush.bf16.msra.mxu0 %v1337
        %1521 = vmatpush.bf16.msra.mxu0 %v1336
        %1522 = vmatpush.bf16.msra.mxu0 %v1335
        %1523 = vmatpush.bf16.msra.mxu0 %v1334
        %1524 = vmatmul.bf16.gmra.mxu0 %v1514
        %v1525 = vpop.f32.mrf.mxu0
        %v1526 = vadd.f32 %v1316, %v1525
        %v1527 = vpop.f32.mrf.mxu0
        %1528 = vdwg.mxu0
        %v1529 = vmax.f32 %v1526, 0.0
        %v1530 = vmul.f32 %v1529, 3.0
        %v1531 = vadd.f32 %v1359, %v1530
        %v1532 = vmul.f32 %v1531, 0.25
        %1533 = vst.msk [vmem:[%s613] sm:$0xff] %vm637, %v1532
        %s1534 = sand.u32 %s353, 1
        %s1535 = scalar_lea.sflag [#allocation4], %s1534
        %s1536 = sand.u32 %s353, 1
        %s1537 = smul.addr %s1536, 8
        %s1538 = scalar_lea.vmem [#allocation13], %s1537
        // Predicated region
        $region101: #{tpu_custom_call.1} parent=75 // pred_check
          %p1539 = pneg %p363
        $region102: #{tpu_custom_call.1} parent=75 // pred_check_branch
          %1541 = sbr.rel (%p1539) target = $region104
        $region103: #{tpu_custom_call.1} parent=75 // pred_region
          %1543 = vsyncadd %s1535, 0
          %s1544 = smul.addr %s36, 8
          %s1545 = scalar_lea.hbm %s14, %s1544
          %s1547 = sshll.u32 %s1538, 4
          %s1548 = int_to_ptr.vmem [resolvable:$true] %s1547
          %s1549 = sshll.u32 %s1545, 4
          %s1550 = int_to_ptr.hbm [resolvable:$true] %s1549
          %1552 = dma.vmem_to_hbm [thread:$0]  %s1548, 128, %s1550, %s1535
        $region104: #{tpu_custom_call.1} parent=75 // pred_fallthru
          _
      $region76: #{tpu_custom_call.1} parent=5 // pred_fallthru
        _
      %p1553 = scmp.le.s32.totalorder 2, %s31
      // Predicated region
      $region105: #{tpu_custom_call.1} parent=5 // pred_check
        %p1554 = pneg %p1553
      $region106: #{tpu_custom_call.1} parent=5 // pred_check_branch
        %1556 = sbr.rel (%p1554) target = $region108
      $region107: #{tpu_custom_call.1} parent=5 // pred_region
        %s1557 = ssub.s32 %s31, 2
        // Predicated region
        $region109: #{tpu_custom_call.1} parent=107 // pred_check
          %p1558 = pneg %p369
        $region110: #{tpu_custom_call.1} parent=107 // pred_check_branch
          %1560 = sbr.rel (%p1558) target = $region112
        $region111: #{tpu_custom_call.1} parent=107 // pred_region
          %s1561 = sand.u32 %s354, 1
          %s1562 = scalar_lea.sflag [#allocation4], %s1561
          %s1563 = sand.u32 %s354, 1
          %s1564 = smul.addr %s1563, 8
          %s1565 = scalar_lea.vmem [#allocation13], %s1564
          %1567 = dma.done %s1562, 128
        $region112: #{tpu_custom_call.1} parent=107 // pred_fallthru
          _
      $region108: #{tpu_custom_call.1} parent=5 // pred_fallthru
        _
    $region6: #{tpu_custom_call.1} parent=1 // loop_footer
      %s35 = sadd.s32 1, %s31
    $region7: #{tpu_custom_call.1} parent=1 // loop_footer_branch
      %30 = sbr.rel target = $region3
    $region8: #{tpu_custom_call.1} parent=1 // loop_exit
      _
    %1568 = vsyncpa [#allocation3], 1
    %s1569 = scalar_lea.sflag [#allocation3], 1
    %1570 = vsyncpa %s1569, 1
    %1571 = vsyncpa [#allocation6], 1
    %s1572 = scalar_lea.sflag [#allocation6], 1
    %1573 = vsyncpa %s1572, 1
    %1574 = vsyncpa [#allocation9], 1
    %1575 = vsyncpa [#allocation12], 1
    %1576 = vsyncpa [#allocation4], 1
    %s1577 = scalar_lea.sflag [#allocation4], 1
    %1578 = vsyncpa %s1577, 1

</llo_original>
